<compile_context>
chip_gen: v7x
topology: tpu7x:2x2x1
jax: 0.10.0
libtpu: 0.0.40
codegen_flags: <defaults>
</compile_context>

<pallas_src>
import functools

import jax
import jax.numpy as jnp
from jax.experimental import pallas as pl
from jax.experimental.pallas import tpu as pltpu  # noqa: F401  (TPU backend)

SEQ = 8
BS = 2
HIDDEN = 32
NB_HEADS = 4
LN_EPS = 1e-5


def _layernorm(y, gamma, beta):
    mu = jnp.mean(y, axis=-1, keepdims=True)
    var = jnp.mean((y - mu) ** 2, axis=-1, keepdims=True)
    return (y - mu) * jax.lax.rsqrt(var + LN_EPS) * gamma + beta


def encoder_kernel(nb_heads, B, S, H,
                   g_ref,        # (B*S, H)   g_seq, batch-major rows
                   posp_ref,     # (B*S, H)   pos @ Wp.T + bcat, tiled over batch
                   wg_ref,       # (H, H)     Wcat[:, :H].T   (pre-transposed)
                   wqkv_ref,     # (H, 3H)    Wqkv.T
                   bqkv_ref,     # (1, 3H)
                   wo_ref,       # (H, H)     Wo.T
                   w1_ref,       # (H, H)     W1.T
                   w2_ref,       # (H, H)     W2.T
                   vecs_ref,     # (7, H)     [bo, b1, b2, g1, be1, g2, be2]
                   out_ref):     # (B*S, H)
    f32 = jnp.float32
    hd = H // nb_heads
    scale = 1.0 / (hd ** 0.5)

    g = g_ref[...]                                                        # (B*S, H)

    # h_cat = LLcat(cat(g, pos))  -- pos part precomputed & folded with bcat
    h_cat = jnp.dot(g, wg_ref[...], preferred_element_type=f32) + posp_ref[...]

    # Packed in_proj -> q, k, v
    qkv = jnp.dot(h_cat, wqkv_ref[...], preferred_element_type=f32) + bqkv_ref[...]
    q = (qkv[:, 0:H] * scale).reshape(B, S, H)
    k = qkv[:, H:2 * H].reshape(B, S, H)
    v = qkv[:, 2 * H:3 * H].reshape(B, S, H)

    # Multi-head self-attention: static 4-way head loop, batched over B via 3-D einsums.
    ctx_parts = []
    for hh in range(nb_heads):
        sl = slice(hh * hd, (hh + 1) * hd)
        qh = q[:, :, sl]                                                  # (B, S, hd)
        kh = k[:, :, sl]
        vh = v[:, :, sl]
        logits = jnp.einsum('bqd,bkd->bqk', qh, kh,
                            preferred_element_type=f32)                   # (B, S, S)
        logits = logits - jnp.max(logits, axis=-1, keepdims=True)
        p = jnp.exp(logits)
        inv = pl.reciprocal(jnp.sum(p, axis=-1, keepdims=True), approx=True)
        p = p * inv
        ctx_h = jnp.einsum('bqk,bkd->bqd', p, vh,
                           preferred_element_type=f32)                    # (B, S, hd)
        ctx_parts.append(ctx_h.reshape(B * S, hd))
    ctx = jnp.concatenate(ctx_parts, axis=-1)                             # (B*S, H)

    attn = jnp.dot(ctx, wo_ref[...], preferred_element_type=f32) + vecs_ref[0:1, :]

    # Residual + LayerNorm 1
    h1 = _layernorm(h_cat + attn, vecs_ref[3:4, :], vecs_ref[4:5, :])

    # MLP: LL2(relu(LL1(h)))
    z = jnp.dot(h1, w1_ref[...], preferred_element_type=f32) + vecs_ref[1:2, :]
    z = jnp.maximum(z, 0.0)
    mlp = jnp.dot(z, w2_ref[...], preferred_element_type=f32) + vecs_ref[2:3, :]

    # Residual + LayerNorm 2
    # TODO(synk): output stays (B*S, H)=(16,32); a lane-dense (B, S*H) store would need an
    # in-kernel sublane->lane relayout that costs more than the ~2-vreg masked store here.
    out_ref[...] = _layernorm(h1 + mlp, vecs_ref[5:6, :], vecs_ref[6:7, :])


def init_params(key, hidden):
    ks = jax.random.split(key, 8)
    s = 0.05
    return {
        "Wcat": jax.random.normal(ks[0], (hidden, 2 * hidden), jnp.float32) * s,
        "bcat": jax.random.normal(ks[1], (1, hidden), jnp.float32) * s,
        "Wqkv": jax.random.normal(ks[2], (3 * hidden, hidden), jnp.float32) * s,
        "bqkv": jax.random.normal(ks[3], (1, 3 * hidden), jnp.float32) * s,
        "Wo":   jax.random.normal(ks[4], (hidden, hidden), jnp.float32) * s,
        "bo":   jax.random.normal(ks[5], (1, hidden), jnp.float32) * s,
        "W1":   jax.random.normal(ks[6], (hidden, hidden), jnp.float32) * s,
        "b1":   jnp.full((1, hidden), 0.01, jnp.float32),
        "W2":   jax.random.normal(ks[7], (hidden, hidden), jnp.float32) * s,
        "b2":   jnp.full((1, hidden), -0.01, jnp.float32),
        "g1":   jnp.ones((1, hidden), jnp.float32),
        "be1":  jnp.zeros((1, hidden), jnp.float32),
        "g2":   jnp.ones((1, hidden), jnp.float32),
        "be2":  jnp.zeros((1, hidden), jnp.float32),
    }


def transformer_encoder(g_seq, pos, params, nb_heads=NB_HEADS):
    """g_seq: (seq, bs, hidden), pos: (seq, hidden)  ->  (seq, bs, hidden)"""
    S, B, H = g_seq.shape

    # Split LLcat weight; the pos half is batch-independent -> precompute once in XLA.
    Wcat = params["Wcat"]                       # (H, 2H)
    wg_t = Wcat[:, :H].T                        # (H, H)
    wp = Wcat[:, H:]                            # (H, H)
    pos_proj = jnp.dot(pos, wp.T) + params["bcat"]          # (S, H)
    posp = jnp.tile(pos_proj, (B, 1))                        # (B*S, H) batch-major

    g_flat = jnp.transpose(g_seq, (1, 0, 2)).reshape(B * S, H)   # batch-major rows

    # Fuse the small per-feature vectors into one (7, H) slab: bo, b1, b2, g1, be1, g2, be2
    vecs = jnp.concatenate([params["bo"], params["b1"], params["b2"],
                            params["g1"], params["be1"],
                            params["g2"], params["be2"]], axis=0)

    out_flat = pl.pallas_call(
        functools.partial(encoder_kernel, nb_heads, B, S, H),
        out_shape=jax.ShapeDtypeStruct((B * S, H), jnp.float32),
        # No grid: single invocation, every operand placed whole in VMEM (default specs).
    )(g_flat, posp, wg_t,
      params["Wqkv"].T, params["bqkv"],
      params["Wo"].T, params["W1"].T, params["W2"].T,
      vecs)

    return out_flat.reshape(B, S, H).transpose(1, 0, 2)          # back to (S, B, H)


def transformer_encoder_ref(g_seq, pos, params, nb_heads=NB_HEADS):
    """Pure-JAX reference with PyTorch semantics (for verification)."""
    S, B, H = g_seq.shape
    hd = H // nb_heads
    pos_b = jnp.broadcast_to(pos[:, None, :], (S, B, H))
    xcat = jnp.concatenate([g_seq, pos_b], axis=2)
    h_cat = jnp.einsum("sbe,he->sbh", xcat, params["Wcat"]) + params["bcat"][0]
    qkv = jnp.einsum("sbh,oh->sbo", h_cat, params["Wqkv"]) + params["bqkv"][0]
    q, k, v = qkv[..., :H], qkv[..., H:2 * H], qkv[..., 2 * H:]

    def split(x):  # (S,B,H) -> (B,nh,S,hd)
        return jnp.transpose(x.reshape(S, B, nb_heads, hd), (1, 2, 0, 3))

    qh, kh, vh = split(q) / (hd ** 0.5), split(k), split(v)
    s = jnp.einsum("bnqd,bnkd->bnqk", qh, kh)
    p = jax.nn.softmax(s, axis=-1)
    ctx = jnp.einsum("bnqk,bnkd->bnqd", p, vh)
    ctx = jnp.transpose(ctx, (2, 0, 1, 3)).reshape(S, B, H)
    attn = jnp.einsum("sbh,oh->sbo", ctx, params["Wo"]) + params["bo"][0]
    h1 = _layernorm(h_cat + attn, params["g1"][0], params["be1"][0])
    z = jnp.maximum(jnp.einsum("sbh,oh->sbo", h1, params["W1"]) + params["b1"][0], 0.0)
    mlp = jnp.einsum("sbh,oh->sbo", z, params["W2"]) + params["b2"][0]
    return _layernorm(h1 + mlp, params["g2"][0], params["be2"][0])


if __name__ == "__main__":
    key = jax.random.PRNGKey(0)
    k_g, k_p, k_w = jax.random.split(key, 3)

    g_seq = jax.random.normal(k_g, (SEQ, BS, HIDDEN), jnp.float32)   # (seq, batch, hidden)
    pos = jax.random.normal(k_p, (SEQ, HIDDEN), jnp.float32)         # (seq, hidden)
    params = init_params(k_w, HIDDEN)

    out = transformer_encoder(g_seq, pos, params)
    out = jax.block_until_ready(out)

    ref = transformer_encoder_ref(g_seq, pos, params)
    assert out.shape == (SEQ, BS, HIDDEN)
    # Slightly relaxed tolerance: softmax uses the EUP approximate reciprocal.
    assert jnp.allclose(out, ref, atol=2e-3, rtol=2e-3), "kernel/reference mismatch"

    print("KERNEL_OK")
</pallas_src>

<mosaic_0001>
module attributes {stable_mosaic.version = 11 : i64} {
  func.func @encoder_kernel(%arg0: memref<16x32xf32, #tpu.memory_space<vmem>>, %arg1: memref<16x32xf32, #tpu.memory_space<vmem>>, %arg2: memref<32x32xf32, #tpu.memory_space<vmem>>, %arg3: memref<32x96xf32, #tpu.memory_space<vmem>>, %arg4: memref<1x96xf32, #tpu.memory_space<vmem>>, %arg5: memref<32x32xf32, #tpu.memory_space<vmem>>, %arg6: memref<32x32xf32, #tpu.memory_space<vmem>>, %arg7: memref<32x32xf32, #tpu.memory_space<vmem>>, %arg8: memref<7x32xf32, #tpu.memory_space<vmem>>, %arg9: memref<16x32xf32, #tpu.memory_space<vmem>>) attributes {dimension_semantics = [], scalar_prefetch = 0 : i64, scratch_operands = 0 : i64, tpu.core_type = #tpu.core_type<tc>} {
    %c0 = arith.constant 0 : index
    %c0_0 = arith.constant 0 : index
    %0 = vector.load %arg0[%c0, %c0_0] : memref<16x32xf32, #tpu.memory_space<vmem>>, vector<16x32xf32>
    %c0_1 = arith.constant 0 : index
    %c0_2 = arith.constant 0 : index
    %1 = vector.load %arg2[%c0_1, %c0_2] : memref<32x32xf32, #tpu.memory_space<vmem>>, vector<32x32xf32>
    %cst = arith.constant dense<0.000000e+00> : vector<16x32xf32>
    %2 = tpu.matmul %0, %1, %cst {dimension_numbers = #tpu.dot_dimension_numbers<[1], [0], [0], [1], [0, 0, 1, 1], [], []>} : vector<16x32xf32>, vector<32x32xf32>, vector<16x32xf32> -> vector<16x32xf32>
    %c0_3 = arith.constant 0 : index
    %c0_4 = arith.constant 0 : index
    %3 = vector.load %arg1[%c0_3, %c0_4] : memref<16x32xf32, #tpu.memory_space<vmem>>, vector<16x32xf32>
    %4 = arith.addf %2, %3 : vector<16x32xf32>
    %c0_5 = arith.constant 0 : index
    %c0_6 = arith.constant 0 : index
    %5 = vector.load %arg3[%c0_5, %c0_6] : memref<32x96xf32, #tpu.memory_space<vmem>>, vector<32x96xf32>
    %cst_7 = arith.constant dense<0.000000e+00> : vector<16x96xf32>
    %6 = tpu.matmul %4, %5, %cst_7 {dimension_numbers = #tpu.dot_dimension_numbers<[1], [0], [0], [1], [0, 0, 1, 1], [], []>} : vector<16x32xf32>, vector<32x96xf32>, vector<16x96xf32> -> vector<16x96xf32>
    %c0_8 = arith.constant 0 : index
    %c0_9 = arith.constant 0 : index
    %7 = vector.load %arg4[%c0_8, %c0_9] : memref<1x96xf32, #tpu.memory_space<vmem>>, vector<1x96xf32>
    %8 = vector.broadcast %7 : vector<1x96xf32> to vector<16x96xf32>
    %9 = arith.addf %6, %8 : vector<16x96xf32>
    %10 = vector.extract_strided_slice %9 {offsets = [0, 0], sizes = [16, 32], strides = [1, 1]} : vector<16x96xf32> to vector<16x32xf32>
    %cst_10 = arith.constant 0.353553385 : f32
    %11 = vector.broadcast %cst_10 : f32 to vector<16x32xf32>
    %12 = arith.mulf %10, %11 : vector<16x32xf32>
    %13 = vector.shape_cast %12 : vector<16x32xf32> to vector<2x8x32xf32>
    %14 = vector.extract_strided_slice %9 {offsets = [0, 32], sizes = [16, 32], strides = [1, 1]} : vector<16x96xf32> to vector<16x32xf32>
    %15 = vector.shape_cast %14 : vector<16x32xf32> to vector<2x8x32xf32>
    %16 = vector.extract_strided_slice %9 {offsets = [0, 64], sizes = [16, 32], strides = [1, 1]} : vector<16x96xf32> to vector<16x32xf32>
    %17 = vector.shape_cast %16 : vector<16x32xf32> to vector<2x8x32xf32>
    %18 = vector.extract_strided_slice %13 {offsets = [0, 0, 0], sizes = [2, 8, 8], strides = [1, 1, 1]} : vector<2x8x32xf32> to vector<2x8x8xf32>
    %19 = vector.extract_strided_slice %15 {offsets = [0, 0, 0], sizes = [2, 8, 8], strides = [1, 1, 1]} : vector<2x8x32xf32> to vector<2x8x8xf32>
    %20 = vector.extract_strided_slice %17 {offsets = [0, 0, 0], sizes = [2, 8, 8], strides = [1, 1, 1]} : vector<2x8x32xf32> to vector<2x8x8xf32>
    "tpu.trace_start"() <{level = 10 : i32, message = "bqd,bkd->bqk"}> : () -> ()
    %cst_11 = arith.constant dense<0.000000e+00> : vector<2x8x8xf32>
    %21 = tpu.matmul %18, %19, %cst_11 {dimension_numbers = #tpu.dot_dimension_numbers<[2], [2], [1], [1], [0, 0, 0, 1, 1, 1], [0], [0]>} : vector<2x8x8xf32>, vector<2x8x8xf32>, vector<2x8x8xf32> -> vector<2x8x8xf32>
    "tpu.trace_stop"() : () -> ()
    %cst_12 = arith.constant dense<0xFF800000> : vector<2x8xf32>
    %22 = vector.multi_reduction <maximumf>, %21, %cst_12 [2] : vector<2x8x8xf32> to vector<2x8xf32>
    %23 = vector.shape_cast %22 : vector<2x8xf32> to vector<2x8x1xf32>
    %24 = vector.broadcast %23 : vector<2x8x1xf32> to vector<2x8x8xf32>
    %25 = arith.subf %21, %24 : vector<2x8x8xf32>
    %26 = math.exp %25 : vector<2x8x8xf32>
    %cst_13 = arith.constant dense<0.000000e+00> : vector<2x8xf32>
    %27 = vector.multi_reduction <add>, %26, %cst_13 [2] : vector<2x8x8xf32> to vector<2x8xf32>
    %28 = vector.shape_cast %27 : vector<2x8xf32> to vector<2x8x1xf32>
    %29 = tpu.reciprocal %28 {approx = true} : vector<2x8x1xf32> -> vector<2x8x1xf32>
    %30 = vector.broadcast %29 : vector<2x8x1xf32> to vector<2x8x8xf32>
    %31 = arith.mulf %26, %30 : vector<2x8x8xf32>
    "tpu.trace_start"() <{level = 10 : i32, message = "bqk,bkd->bqd"}> : () -> ()
    %cst_14 = arith.constant dense<0.000000e+00> : vector<2x8x8xf32>
    %32 = tpu.matmul %31, %20, %cst_14 {dimension_numbers = #tpu.dot_dimension_numbers<[2], [1], [1], [2], [0, 0, 0, 1, 1, 2], [0], [0]>} : vector<2x8x8xf32>, vector<2x8x8xf32>, vector<2x8x8xf32> -> vector<2x8x8xf32>
    "tpu.trace_stop"() : () -> ()
    %33 = vector.shape_cast %32 : vector<2x8x8xf32> to vector<16x8xf32>
    %34 = vector.extract_strided_slice %13 {offsets = [0, 0, 8], sizes = [2, 8, 8], strides = [1, 1, 1]} : vector<2x8x32xf32> to vector<2x8x8xf32>
    %35 = vector.extract_strided_slice %15 {offsets = [0, 0, 8], sizes = [2, 8, 8], strides = [1, 1, 1]} : vector<2x8x32xf32> to vector<2x8x8xf32>
    %36 = vector.extract_strided_slice %17 {offsets = [0, 0, 8], sizes = [2, 8, 8], strides = [1, 1, 1]} : vector<2x8x32xf32> to vector<2x8x8xf32>
    "tpu.trace_start"() <{level = 10 : i32, message = "bqd,bkd->bqk"}> : () -> ()
    %cst_15 = arith.constant dense<0.000000e+00> : vector<2x8x8xf32>
    %37 = tpu.matmul %34, %35, %cst_15 {dimension_numbers = #tpu.dot_dimension_numbers<[2], [2], [1], [1], [0, 0, 0, 1, 1, 1], [0], [0]>} : vector<2x8x8xf32>, vector<2x8x8xf32>, vector<2x8x8xf32> -> vector<2x8x8xf32>
    "tpu.trace_stop"() : () -> ()
    %cst_16 = arith.constant dense<0xFF800000> : vector<2x8xf32>
    %38 = vector.multi_reduction <maximumf>, %37, %cst_16 [2] : vector<2x8x8xf32> to vector<2x8xf32>
    %39 = vector.shape_cast %38 : vector<2x8xf32> to vector<2x8x1xf32>
    %40 = vector.broadcast %39 : vector<2x8x1xf32> to vector<2x8x8xf32>
    %41 = arith.subf %37, %40 : vector<2x8x8xf32>
    %42 = math.exp %41 : vector<2x8x8xf32>
    %cst_17 = arith.constant dense<0.000000e+00> : vector<2x8xf32>
    %43 = vector.multi_reduction <add>, %42, %cst_17 [2] : vector<2x8x8xf32> to vector<2x8xf32>
    %44 = vector.shape_cast %43 : vector<2x8xf32> to vector<2x8x1xf32>
    %45 = tpu.reciprocal %44 {approx = true} : vector<2x8x1xf32> -> vector<2x8x1xf32>
    %46 = vector.broadcast %45 : vector<2x8x1xf32> to vector<2x8x8xf32>
    %47 = arith.mulf %42, %46 : vector<2x8x8xf32>
    "tpu.trace_start"() <{level = 10 : i32, message = "bqk,bkd->bqd"}> : () -> ()
    %cst_18 = arith.constant dense<0.000000e+00> : vector<2x8x8xf32>
    %48 = tpu.matmul %47, %36, %cst_18 {dimension_numbers = #tpu.dot_dimension_numbers<[2], [1], [1], [2], [0, 0, 0, 1, 1, 2], [0], [0]>} : vector<2x8x8xf32>, vector<2x8x8xf32>, vector<2x8x8xf32> -> vector<2x8x8xf32>
    "tpu.trace_stop"() : () -> ()
    %49 = vector.shape_cast %48 : vector<2x8x8xf32> to vector<16x8xf32>
    %50 = vector.extract_strided_slice %13 {offsets = [0, 0, 16], sizes = [2, 8, 8], strides = [1, 1, 1]} : vector<2x8x32xf32> to vector<2x8x8xf32>
    %51 = vector.extract_strided_slice %15 {offsets = [0, 0, 16], sizes = [2, 8, 8], strides = [1, 1, 1]} : vector<2x8x32xf32> to vector<2x8x8xf32>
    %52 = vector.extract_strided_slice %17 {offsets = [0, 0, 16], sizes = [2, 8, 8], strides = [1, 1, 1]} : vector<2x8x32xf32> to vector<2x8x8xf32>
    "tpu.trace_start"() <{level = 10 : i32, message = "bqd,bkd->bqk"}> : () -> ()
    %cst_19 = arith.constant dense<0.000000e+00> : vector<2x8x8xf32>
    %53 = tpu.matmul %50, %51, %cst_19 {dimension_numbers = #tpu.dot_dimension_numbers<[2], [2], [1], [1], [0, 0, 0, 1, 1, 1], [0], [0]>} : vector<2x8x8xf32>, vector<2x8x8xf32>, vector<2x8x8xf32> -> vector<2x8x8xf32>
    "tpu.trace_stop"() : () -> ()
    %cst_20 = arith.constant dense<0xFF800000> : vector<2x8xf32>
    %54 = vector.multi_reduction <maximumf>, %53, %cst_20 [2] : vector<2x8x8xf32> to vector<2x8xf32>
    %55 = vector.shape_cast %54 : vector<2x8xf32> to vector<2x8x1xf32>
    %56 = vector.broadcast %55 : vector<2x8x1xf32> to vector<2x8x8xf32>
    %57 = arith.subf %53, %56 : vector<2x8x8xf32>
    %58 = math.exp %57 : vector<2x8x8xf32>
    %cst_21 = arith.constant dense<0.000000e+00> : vector<2x8xf32>
    %59 = vector.multi_reduction <add>, %58, %cst_21 [2] : vector<2x8x8xf32> to vector<2x8xf32>
    %60 = vector.shape_cast %59 : vector<2x8xf32> to vector<2x8x1xf32>
    %61 = tpu.reciprocal %60 {approx = true} : vector<2x8x1xf32> -> vector<2x8x1xf32>
    %62 = vector.broadcast %61 : vector<2x8x1xf32> to vector<2x8x8xf32>
    %63 = arith.mulf %58, %62 : vector<2x8x8xf32>
    "tpu.trace_start"() <{level = 10 : i32, message = "bqk,bkd->bqd"}> : () -> ()
    %cst_22 = arith.constant dense<0.000000e+00> : vector<2x8x8xf32>
    %64 = tpu.matmul %63, %52, %cst_22 {dimension_numbers = #tpu.dot_dimension_numbers<[2], [1], [1], [2], [0, 0, 0, 1, 1, 2], [0], [0]>} : vector<2x8x8xf32>, vector<2x8x8xf32>, vector<2x8x8xf32> -> vector<2x8x8xf32>
    "tpu.trace_stop"() : () -> ()
    %65 = vector.shape_cast %64 : vector<2x8x8xf32> to vector<16x8xf32>
    %66 = vector.extract_strided_slice %13 {offsets = [0, 0, 24], sizes = [2, 8, 8], strides = [1, 1, 1]} : vector<2x8x32xf32> to vector<2x8x8xf32>
    %67 = vector.extract_strided_slice %15 {offsets = [0, 0, 24], sizes = [2, 8, 8], strides = [1, 1, 1]} : vector<2x8x32xf32> to vector<2x8x8xf32>
    %68 = vector.extract_strided_slice %17 {offsets = [0, 0, 24], sizes = [2, 8, 8], strides = [1, 1, 1]} : vector<2x8x32xf32> to vector<2x8x8xf32>
    "tpu.trace_start"() <{level = 10 : i32, message = "bqd,bkd->bqk"}> : () -> ()
    %cst_23 = arith.constant dense<0.000000e+00> : vector<2x8x8xf32>
    %69 = tpu.matmul %66, %67, %cst_23 {dimension_numbers = #tpu.dot_dimension_numbers<[2], [2], [1], [1], [0, 0, 0, 1, 1, 1], [0], [0]>} : vector<2x8x8xf32>, vector<2x8x8xf32>, vector<2x8x8xf32> -> vector<2x8x8xf32>
    "tpu.trace_stop"() : () -> ()
    %cst_24 = arith.constant dense<0xFF800000> : vector<2x8xf32>
    %70 = vector.multi_reduction <maximumf>, %69, %cst_24 [2] : vector<2x8x8xf32> to vector<2x8xf32>
    %71 = vector.shape_cast %70 : vector<2x8xf32> to vector<2x8x1xf32>
    %72 = vector.broadcast %71 : vector<2x8x1xf32> to vector<2x8x8xf32>
    %73 = arith.subf %69, %72 : vector<2x8x8xf32>
    %74 = math.exp %73 : vector<2x8x8xf32>
    %cst_25 = arith.constant dense<0.000000e+00> : vector<2x8xf32>
    %75 = vector.multi_reduction <add>, %74, %cst_25 [2] : vector<2x8x8xf32> to vector<2x8xf32>
    %76 = vector.shape_cast %75 : vector<2x8xf32> to vector<2x8x1xf32>
    %77 = tpu.reciprocal %76 {approx = true} : vector<2x8x1xf32> -> vector<2x8x1xf32>
    %78 = vector.broadcast %77 : vector<2x8x1xf32> to vector<2x8x8xf32>
    %79 = arith.mulf %74, %78 : vector<2x8x8xf32>
    "tpu.trace_start"() <{level = 10 : i32, message = "bqk,bkd->bqd"}> : () -> ()
    %cst_26 = arith.constant dense<0.000000e+00> : vector<2x8x8xf32>
    %80 = tpu.matmul %79, %68, %cst_26 {dimension_numbers = #tpu.dot_dimension_numbers<[2], [1], [1], [2], [0, 0, 0, 1, 1, 2], [0], [0]>} : vector<2x8x8xf32>, vector<2x8x8xf32>, vector<2x8x8xf32> -> vector<2x8x8xf32>
    "tpu.trace_stop"() : () -> ()
    %81 = vector.shape_cast %80 : vector<2x8x8xf32> to vector<16x8xf32>
    %82 = tpu.concatenate %33, %49, %65, %81 in 1 : vector<16x8xf32>, vector<16x8xf32>, vector<16x8xf32>, vector<16x8xf32> -> vector<16x32xf32>
    %c0_27 = arith.constant 0 : index
    %c0_28 = arith.constant 0 : index
    %83 = vector.load %arg5[%c0_27, %c0_28] : memref<32x32xf32, #tpu.memory_space<vmem>>, vector<32x32xf32>
    %cst_29 = arith.constant dense<0.000000e+00> : vector<16x32xf32>
    %84 = tpu.matmul %82, %83, %cst_29 {dimension_numbers = #tpu.dot_dimension_numbers<[1], [0], [0], [1], [0, 0, 1, 1], [], []>} : vector<16x32xf32>, vector<32x32xf32>, vector<16x32xf32> -> vector<16x32xf32>
    %c0_30 = arith.constant 0 : index
    %c0_31 = arith.constant 0 : index
    %85 = vector.load %arg8[%c0_30, %c0_31] : memref<7x32xf32, #tpu.memory_space<vmem>>, vector<1x32xf32>
    %86 = vector.broadcast %85 : vector<1x32xf32> to vector<16x32xf32>
    %87 = arith.addf %84, %86 : vector<16x32xf32>
    %88 = arith.addf %4, %87 : vector<16x32xf32>
    %c3 = arith.constant 3 : index
    %c0_32 = arith.constant 0 : index
    %89 = vector.load %arg8[%c3, %c0_32] : memref<7x32xf32, #tpu.memory_space<vmem>>, vector<1x32xf32>
    %c4 = arith.constant 4 : index
    %c0_33 = arith.constant 0 : index
    %90 = vector.load %arg8[%c4, %c0_33] : memref<7x32xf32, #tpu.memory_space<vmem>>, vector<1x32xf32>
    %cst_34 = arith.constant dense<0.000000e+00> : vector<16xf32>
    %91 = vector.multi_reduction <add>, %88, %cst_34 [1] : vector<16x32xf32> to vector<16xf32>
    %92 = vector.shape_cast %91 : vector<16xf32> to vector<16x1xf32>
    %cst_35 = arith.constant 3.200000e+01 : f32
    %93 = vector.broadcast %cst_35 : f32 to vector<16x1xf32>
    %94 = arith.divf %92, %93 : vector<16x1xf32>
    %95 = vector.broadcast %94 : vector<16x1xf32> to vector<16x32xf32>
    %96 = arith.subf %88, %95 : vector<16x32xf32>
    %97 = arith.mulf %96, %96 : vector<16x32xf32>
    %cst_36 = arith.constant dense<0.000000e+00> : vector<16xf32>
    %98 = vector.multi_reduction <add>, %97, %cst_36 [1] : vector<16x32xf32> to vector<16xf32>
    %99 = vector.shape_cast %98 : vector<16xf32> to vector<16x1xf32>
    %cst_37 = arith.constant 3.200000e+01 : f32
    %100 = vector.broadcast %cst_37 : f32 to vector<16x1xf32>
    %101 = arith.divf %99, %100 : vector<16x1xf32>
    %102 = vector.broadcast %94 : vector<16x1xf32> to vector<16x32xf32>
    %103 = arith.subf %88, %102 : vector<16x32xf32>
    %cst_38 = arith.constant 9.99999974E-6 : f32
    %104 = vector.broadcast %cst_38 : f32 to vector<16x1xf32>
    %105 = arith.addf %101, %104 : vector<16x1xf32>
    %106 = math.rsqrt %105 : vector<16x1xf32>
    %107 = vector.broadcast %106 : vector<16x1xf32> to vector<16x32xf32>
    %108 = arith.mulf %103, %107 : vector<16x32xf32>
    %109 = vector.broadcast %89 : vector<1x32xf32> to vector<16x32xf32>
    %110 = arith.mulf %108, %109 : vector<16x32xf32>
    %111 = vector.broadcast %90 : vector<1x32xf32> to vector<16x32xf32>
    %112 = arith.addf %110, %111 : vector<16x32xf32>
    %c0_39 = arith.constant 0 : index
    %c0_40 = arith.constant 0 : index
    %113 = vector.load %arg6[%c0_39, %c0_40] : memref<32x32xf32, #tpu.memory_space<vmem>>, vector<32x32xf32>
    %cst_41 = arith.constant dense<0.000000e+00> : vector<16x32xf32>
    %114 = tpu.matmul %112, %113, %cst_41 {dimension_numbers = #tpu.dot_dimension_numbers<[1], [0], [0], [1], [0, 0, 1, 1], [], []>} : vector<16x32xf32>, vector<32x32xf32>, vector<16x32xf32> -> vector<16x32xf32>
    %c1 = arith.constant 1 : index
    %c0_42 = arith.constant 0 : index
    %115 = vector.load %arg8[%c1, %c0_42] : memref<7x32xf32, #tpu.memory_space<vmem>>, vector<1x32xf32>
    %116 = vector.broadcast %115 : vector<1x32xf32> to vector<16x32xf32>
    %117 = arith.addf %114, %116 : vector<16x32xf32>
    %cst_43 = arith.constant 0.000000e+00 : f32
    %118 = vector.broadcast %cst_43 : f32 to vector<16x32xf32>
    %119 = arith.maximumf %117, %118 : vector<16x32xf32>
    %c0_44 = arith.constant 0 : index
    %c0_45 = arith.constant 0 : index
    %120 = vector.load %arg7[%c0_44, %c0_45] : memref<32x32xf32, #tpu.memory_space<vmem>>, vector<32x32xf32>
    %cst_46 = arith.constant dense<0.000000e+00> : vector<16x32xf32>
    %121 = tpu.matmul %119, %120, %cst_46 {dimension_numbers = #tpu.dot_dimension_numbers<[1], [0], [0], [1], [0, 0, 1, 1], [], []>} : vector<16x32xf32>, vector<32x32xf32>, vector<16x32xf32> -> vector<16x32xf32>
    %c2 = arith.constant 2 : index
    %c0_47 = arith.constant 0 : index
    %122 = vector.load %arg8[%c2, %c0_47] : memref<7x32xf32, #tpu.memory_space<vmem>>, vector<1x32xf32>
    %123 = vector.broadcast %122 : vector<1x32xf32> to vector<16x32xf32>
    %124 = arith.addf %121, %123 : vector<16x32xf32>
    %125 = arith.addf %112, %124 : vector<16x32xf32>
    %c5 = arith.constant 5 : index
    %c0_48 = arith.constant 0 : index
    %126 = vector.load %arg8[%c5, %c0_48] : memref<7x32xf32, #tpu.memory_space<vmem>>, vector<1x32xf32>
    %c6 = arith.constant 6 : index
    %c0_49 = arith.constant 0 : index
    %127 = vector.load %arg8[%c6, %c0_49] : memref<7x32xf32, #tpu.memory_space<vmem>>, vector<1x32xf32>
    %cst_50 = arith.constant dense<0.000000e+00> : vector<16xf32>
    %128 = vector.multi_reduction <add>, %125, %cst_50 [1] : vector<16x32xf32> to vector<16xf32>
    %129 = vector.shape_cast %128 : vector<16xf32> to vector<16x1xf32>
    %cst_51 = arith.constant 3.200000e+01 : f32
    %130 = vector.broadcast %cst_51 : f32 to vector<16x1xf32>
    %131 = arith.divf %129, %130 : vector<16x1xf32>
    %132 = vector.broadcast %131 : vector<16x1xf32> to vector<16x32xf32>
    %133 = arith.subf %125, %132 : vector<16x32xf32>
    %134 = arith.mulf %133, %133 : vector<16x32xf32>
    %cst_52 = arith.constant dense<0.000000e+00> : vector<16xf32>
    %135 = vector.multi_reduction <add>, %134, %cst_52 [1] : vector<16x32xf32> to vector<16xf32>
    %136 = vector.shape_cast %135 : vector<16xf32> to vector<16x1xf32>
    %cst_53 = arith.constant 3.200000e+01 : f32
    %137 = vector.broadcast %cst_53 : f32 to vector<16x1xf32>
    %138 = arith.divf %136, %137 : vector<16x1xf32>
    %139 = vector.broadcast %131 : vector<16x1xf32> to vector<16x32xf32>
    %140 = arith.subf %125, %139 : vector<16x32xf32>
    %cst_54 = arith.constant 9.99999974E-6 : f32
    %141 = vector.broadcast %cst_54 : f32 to vector<16x1xf32>
    %142 = arith.addf %138, %141 : vector<16x1xf32>
    %143 = math.rsqrt %142 : vector<16x1xf32>
    %144 = vector.broadcast %143 : vector<16x1xf32> to vector<16x32xf32>
    %145 = arith.mulf %140, %144 : vector<16x32xf32>
    %146 = vector.broadcast %126 : vector<1x32xf32> to vector<16x32xf32>
    %147 = arith.mulf %145, %146 : vector<16x32xf32>
    %148 = vector.broadcast %127 : vector<1x32xf32> to vector<16x32xf32>
    %149 = arith.addf %147, %148 : vector<16x32xf32>
    %c0_55 = arith.constant 0 : index
    %c0_56 = arith.constant 0 : index
    %150 = vector.load %arg9[%c0_55, %c0_56] : memref<16x32xf32, #tpu.memory_space<vmem>>, vector<16x32xf32>
    tpu.vector_store %arg9[%c0_55, %c0_56], %149 {strides = array<i32>} : memref<16x32xf32, #tpu.memory_space<vmem>>, vector<16x32xf32>,
    return
  }
}

</mosaic_0001>

<llo_original>
// kernel: tpu_custom_call.1
$region0: #{tpu_custom_call.1}
  #allocation0 [shape = 'u32[]', space=smem, size = 0x4, offset = 0x4, fixed_abs, tag = 'smem constant byte address 0x4 - core index']
  #allocation1 [shape = 'u32[144,128]{1,0:T(1,128)}', space=vmem, size = 0x12000, scoped, tag = 'internal scratch']
  %s0 = inlined_call_operand.hbm [shape: f32[16,32], index: 0, kind: input, shape index: {}]
  %s1 = inlined_call_operand.hbm [shape: f32[16,32], index: 1, kind: input, shape index: {}]
  %s2 = inlined_call_operand.hbm [shape: f32[32,32], index: 2, kind: input, shape index: {}]
  %s3 = inlined_call_operand.hbm [shape: f32[32,96], index: 3, kind: input, shape index: {}]
  %s4 = inlined_call_operand.vmem [shape: f32[1,96], index: 4, kind: input, shape index: {}]
  %s5 = inlined_call_operand.hbm [shape: f32[32,32], index: 5, kind: input, shape index: {}]
  %s6 = inlined_call_operand.hbm [shape: f32[32,32], index: 6, kind: input, shape index: {}]
  %s7 = inlined_call_operand.hbm [shape: f32[32,32], index: 7, kind: input, shape index: {}]
  %s8 = inlined_call_operand.vmem [shape: f32[7,32], index: 8, kind: input, shape index: {}]
  %s9 = inlined_call_operand.hbm [shape: f32[16,32], index: 9, kind: output, shape index: {}]
  %s10 = sld [smem:[#allocation0]]
  $region74: #{tpu_custom_call.1} parent=0
    _
  %s12 = ssub.s32 1, %s10
  %s13 = scalar_select 0, %s12, %s10
  $region1: #{tpu_custom_call.1} parent=0
    #allocation2 [shape = 'u8[8192]{0}', space=vmem, size = 0x2000, scoped, tag = 'input window, operand 0, single buffered']
    #allocation3 [shape = 's32[1]{0}', space=sflag, size = 0x4, scoped, tag = 'scoped memory for tpu_custom_call.1']
    #allocation4 [shape = 's32[1]{0}', space=sflag, size = 0x4, scoped, tag = 'scoped memory for tpu_custom_call.1']
    #allocation5 [shape = 'u8[8192]{0}', space=vmem, size = 0x2000, scoped, tag = 'input window, operand 1, single buffered']
    #allocation6 [shape = 's32[1]{0}', space=sflag, size = 0x4, scoped, tag = 'scoped memory for tpu_custom_call.1']
    #allocation7 [shape = 'u8[16384]{0}', space=vmem, size = 0x4000, scoped, tag = 'input window, operand 2, single buffered']
    #allocation8 [shape = 'u8[16384]{0}', space=vmem, size = 0x4000, scoped, tag = 'input window, operand 3, single buffered']
    #allocation9 [shape = 's32[1]{0}', space=sflag, size = 0x4, scoped, tag = 'scoped memory for tpu_custom_call.1']
    #allocation10 [shape = 'u8[16384]{0}', space=vmem, size = 0x4000, scoped, tag = 'input window, operand 5, single buffered']
    #allocation11 [shape = 'u8[16384]{0}', space=vmem, size = 0x4000, scoped, tag = 'input window, operand 6, single buffered']
    #allocation12 [shape = 's32[1]{0}', space=sflag, size = 0x4, scoped, tag = 'scoped memory for tpu_custom_call.1']
    #allocation13 [shape = 'u8[16384]{0}', space=vmem, size = 0x4000, scoped, tag = 'input window, operand 7, single buffered']
    #allocation14 [shape = 'u8[8192]{0}', space=vmem, size = 0x2000, scoped, tag = 'output window, operand 0, single buffered']
    %14 = vsyncpa [#allocation3], 0
    %15 = vsyncpa [#allocation6], 0
    %16 = vsyncpa [#allocation9], 0
    %17 = vsyncpa [#allocation12], 0
    %18 = vsyncpa [#allocation4], 0
    // Predicated region
    $region2: #{tpu_custom_call.1} parent=1 // pred_check
      _
    $region3: #{tpu_custom_call.1} parent=1 // pred_check_branch
      %20 = sbr.rel (0) target = $region5
    $region4: #{tpu_custom_call.1} parent=1 // pred_region
      %s22 = ssub.s32 256, 256
      %23 = vsyncadd [#allocation3], %s22
      %s24 = sshll.u32 [#allocation2], 4
      %s25 = int_to_ptr.vmem [resolvable:$true] %s24
      %30 = dma.hbm_to_vmem [thread:$0]  %s0, 256, %s25, [#allocation3], 128, 128, 8
    $region5: #{tpu_custom_call.1} parent=1 // pred_fallthru
      _
    // Predicated region
    $region6: #{tpu_custom_call.1} parent=1 // pred_check
      _
    $region7: #{tpu_custom_call.1} parent=1 // pred_check_branch
      %32 = sbr.rel (0) target = $region9
    $region8: #{tpu_custom_call.1} parent=1 // pred_region
      %s34 = ssub.s32 256, 256
      %35 = vsyncadd [#allocation6], %s34
      %s36 = sshll.u32 [#allocation5], 4
      %s37 = int_to_ptr.vmem [resolvable:$true] %s36
      %42 = dma.hbm_to_vmem [thread:$0]  %s1, 256, %s37, [#allocation6], 128, 128, 8
    $region9: #{tpu_custom_call.1} parent=1 // pred_fallthru
      _
    // Predicated region
    $region10: #{tpu_custom_call.1} parent=1 // pred_check
      _
    $region11: #{tpu_custom_call.1} parent=1 // pred_check_branch
      %44 = sbr.rel (0) target = $region13
    $region12: #{tpu_custom_call.1} parent=1 // pred_region
      %s46 = ssub.s32 512, 512
      %47 = vsyncadd [#allocation6], %s46
      %s48 = sshll.u32 [#allocation7], 4
      %s49 = int_to_ptr.vmem [resolvable:$true] %s48
      %54 = dma.hbm_to_vmem [thread:$0]  %s2, 512, %s49, [#allocation6], 128, 128, 8
    $region13: #{tpu_custom_call.1} parent=1 // pred_fallthru
      _
    // Predicated region
    $region14: #{tpu_custom_call.1} parent=1 // pred_check
      _
    $region15: #{tpu_custom_call.1} parent=1 // pred_check_branch
      %56 = sbr.rel (0) target = $region17
    $region16: #{tpu_custom_call.1} parent=1 // pred_region
      %s58 = ssub.s32 512, 512
      %59 = vsyncadd [#allocation9], %s58
      %s60 = sshll.u32 [#allocation8], 4
      %s61 = int_to_ptr.vmem [resolvable:$true] %s60
      %66 = dma.hbm_to_vmem [thread:$0]  %s3, 512, %s61, [#allocation9], 128, 128, 8
    $region17: #{tpu_custom_call.1} parent=1 // pred_fallthru
      _
    // Predicated region
    $region18: #{tpu_custom_call.1} parent=1 // pred_check
      _
    $region19: #{tpu_custom_call.1} parent=1 // pred_check_branch
      %68 = sbr.rel (0) target = $region21
    $region20: #{tpu_custom_call.1} parent=1 // pred_region
      _
    $region21: #{tpu_custom_call.1} parent=1 // pred_fallthru
      _
    // Predicated region
    $region22: #{tpu_custom_call.1} parent=1 // pred_check
      _
    $region23: #{tpu_custom_call.1} parent=1 // pred_check_branch
      %70 = sbr.rel (0) target = $region25
    $region24: #{tpu_custom_call.1} parent=1 // pred_region
      %s72 = ssub.s32 512, 512
      %73 = vsyncadd [#allocation9], %s72
      %s74 = sshll.u32 [#allocation10], 4
      %s75 = int_to_ptr.vmem [resolvable:$true] %s74
      %80 = dma.hbm_to_vmem [thread:$0]  %s5, 512, %s75, [#allocation9], 128, 128, 8
    $region25: #{tpu_custom_call.1} parent=1 // pred_fallthru
      _
    // Predicated region
    $region26: #{tpu_custom_call.1} parent=1 // pred_check
      _
    $region27: #{tpu_custom_call.1} parent=1 // pred_check_branch
      %82 = sbr.rel (0) target = $region29
    $region28: #{tpu_custom_call.1} parent=1 // pred_region
      %s84 = ssub.s32 512, 512
      %85 = vsyncadd [#allocation12], %s84
      %s86 = sshll.u32 [#allocation11], 4
      %s87 = int_to_ptr.vmem [resolvable:$true] %s86
      %92 = dma.hbm_to_vmem [thread:$0]  %s6, 512, %s87, [#allocation12], 128, 128, 8
    $region29: #{tpu_custom_call.1} parent=1 // pred_fallthru
      _
    // Predicated region
    $region30: #{tpu_custom_call.1} parent=1 // pred_check
      _
    $region31: #{tpu_custom_call.1} parent=1 // pred_check_branch
      %94 = sbr.rel (0) target = $region33
    $region32: #{tpu_custom_call.1} parent=1 // pred_region
      %s96 = ssub.s32 512, 512
      %97 = vsyncadd [#allocation12], %s96
      %s98 = sshll.u32 [#allocation13], 4
      %s99 = int_to_ptr.vmem [resolvable:$true] %s98
      %104 = dma.hbm_to_vmem [thread:$0]  %s7, 512, %s99, [#allocation12], 128, 128, 8
    $region33: #{tpu_custom_call.1} parent=1 // pred_fallthru
      _
    // Predicated region
    $region34: #{tpu_custom_call.1} parent=1 // pred_check
      _
    $region35: #{tpu_custom_call.1} parent=1 // pred_check_branch
      %106 = sbr.rel (0) target = $region37
    $region36: #{tpu_custom_call.1} parent=1 // pred_region
      _
    $region37: #{tpu_custom_call.1} parent=1 // pred_fallthru
      _
    // Predicated region
    $region38: #{tpu_custom_call.1} parent=1 // pred_check
      _
    $region39: #{tpu_custom_call.1} parent=1 // pred_check_branch
      %108 = sbr.rel (0) target = $region41
    $region40: #{tpu_custom_call.1} parent=1 // pred_region
      %109 = dma.done [#allocation3], 256
    $region41: #{tpu_custom_call.1} parent=1 // pred_fallthru
      _
    // Predicated region
    $region42: #{tpu_custom_call.1} parent=1 // pred_check
      _
    $region43: #{tpu_custom_call.1} parent=1 // pred_check_branch
      %111 = sbr.rel (0) target = $region45
    $region44: #{tpu_custom_call.1} parent=1 // pred_region
      %112 = dma.done [#allocation6], 256
    $region45: #{tpu_custom_call.1} parent=1 // pred_fallthru
      _
    // Predicated region
    $region46: #{tpu_custom_call.1} parent=1 // pred_check
      _
    $region47: #{tpu_custom_call.1} parent=1 // pred_check_branch
      %114 = sbr.rel (0) target = $region49
    $region48: #{tpu_custom_call.1} parent=1 // pred_region
      %115 = dma.done [#allocation6], 512
    $region49: #{tpu_custom_call.1} parent=1 // pred_fallthru
      _
    // Predicated region
    $region50: #{tpu_custom_call.1} parent=1 // pred_check
      _
    $region51: #{tpu_custom_call.1} parent=1 // pred_check_branch
      %117 = sbr.rel (0) target = $region53
    $region52: #{tpu_custom_call.1} parent=1 // pred_region
      %118 = dma.done [#allocation9], 512
    $region53: #{tpu_custom_call.1} parent=1 // pred_fallthru
      _
    // Predicated region
    $region54: #{tpu_custom_call.1} parent=1 // pred_check
      _
    $region55: #{tpu_custom_call.1} parent=1 // pred_check_branch
      %120 = sbr.rel (0) target = $region57
    $region56: #{tpu_custom_call.1} parent=1 // pred_region
      %121 = dma.done [#allocation9], 512
    $region57: #{tpu_custom_call.1} parent=1 // pred_fallthru
      _
    // Predicated region
    $region58: #{tpu_custom_call.1} parent=1 // pred_check
      _
    $region59: #{tpu_custom_call.1} parent=1 // pred_check_branch
      %123 = sbr.rel (0) target = $region61
    $region60: #{tpu_custom_call.1} parent=1 // pred_region
      %124 = dma.done [#allocation12], 512
    $region61: #{tpu_custom_call.1} parent=1 // pred_fallthru
      _
    // Predicated region
    $region62: #{tpu_custom_call.1} parent=1 // pred_check
      _
    $region63: #{tpu_custom_call.1} parent=1 // pred_check_branch
      %126 = sbr.rel (0) target = $region65
    $region64: #{tpu_custom_call.1} parent=1 // pred_region
      %127 = dma.done [#allocation12], 512
    $region65: #{tpu_custom_call.1} parent=1 // pred_fallthru
      _
    %v128 = vld [vmem:[#allocation2] sm:$0xff]
    %v129 = vld [vmem:[#allocation2 + $0x8] sm:$0xff]
    %v130 = vld [vmem:[#allocation7] sm:$0xff]
    %v131 = vld [vmem:[#allocation7 + $0x8] sm:$0xff]
    %v132 = vld [vmem:[#allocation7 + $0x10] sm:$0xff]
    %v133 = vld [vmem:[#allocation7 + $0x18] sm:$0xff]
    %v134 = vld [vmem:[#allocation5] sm:$0xff]
    %v135 = vld [vmem:[#allocation5 + $0x8] sm:$0xff]
    %vm136 = vcmask 261120
    %v138 = vsel %vm136, %v128, 0
    %v141 = vsel %vm136, %v129, 0
    %143 = vmatprep.subr.mxu0 0.0
    %144 = vmatpush1.msra.mxu0 %v130
    %145 = vmatprep.subr.mxu0 0.0
    %146 = vmatpush1.msra.mxu0 %v131
    %147 = vmatprep.subr.mxu0 0.0
    %148 = vmatpush1.msra.mxu0 %v132
    %149 = vmatprep.subr.mxu0 0.0
    %150 = vmatpush1.msra.mxu0 %v133
    %151 = vmatprep.subr.mxu0 0.0
    %152 = vmatpush1.msra.mxu0 0.0
    %153 = vmatprep.subr.mxu0 0.0
    %154 = vmatpush1.msra.mxu0 0.0
    %155 = vmatprep.subr.mxu0 0.0
    %156 = vmatpush1.msra.mxu0 0.0
    %157 = vmatprep.subr.mxu0 0.0
    %158 = vmatpush1.msra.mxu0 0.0
    %159 = vmatprep.subr.mxu0 0.0
    %160 = vmatpush1.msra.mxu0 0.0
    %161 = vmatprep.subr.mxu0 0.0
    %162 = vmatpush1.msra.mxu0 0.0
    %163 = vmatprep.subr.mxu0 0.0
    %164 = vmatpush1.msra.mxu0 0.0
    %165 = vmatprep.subr.mxu0 0.0
    %166 = vmatpush1.msra.mxu0 0.0
    %167 = vmatprep.subr.mxu0 0.0
    %168 = vmatpush1.msra.mxu0 0.0
    %169 = vmatprep.subr.mxu0 0.0
    %170 = vmatpush1.msra.mxu0 0.0
    %171 = vmatprep.subr.mxu0 0.0
    %172 = vmatpush1.msra.mxu0 0.0
    %173 = vmatprep.subr.mxu0 0.0
    %174 = vmatpush1.msra.mxu0 0.0
    %175 = vmatprep.subr.mxu0 0.0
    %176 = vmatpush1.msra.mxu0 0.0
    %177 = vmatprep.subr.mxu0 0.0
    %178 = vmatpush1.msra.mxu0 0.0
    %179 = vmatprep.subr.mxu0 0.0
    %180 = vmatpush1.msra.mxu0 0.0
    %181 = vmatprep.subr.mxu0 0.0
    %182 = vmatpush1.msra.mxu0 0.0
    %183 = vmatprep.subr.mxu0 0.0
    %184 = vmatpush1.msra.mxu0 0.0
    %185 = vmatprep.subr.mxu0 0.0
    %186 = vmatpush1.msra.mxu0 0.0
    %187 = vmatprep.subr.mxu0 0.0
    %188 = vmatpush1.msra.mxu0 0.0
    %189 = vmatprep.subr.mxu0 0.0
    %190 = vmatpush1.msra.mxu0 0.0
    %191 = vmatprep.subr.mxu0 0.0
    %192 = vmatpush1.msra.mxu0 0.0
    %193 = vmatprep.subr.mxu0 0.0
    %194 = vmatpush1.msra.mxu0 0.0
    %195 = vmatprep.subr.mxu0 0.0
    %196 = vmatpush1.msra.mxu0 0.0
    %197 = vmatprep.subr.mxu0 0.0
    %198 = vmatpush1.msra.mxu0 0.0
    %199 = vmatprep.subr.mxu0 0.0
    %200 = vmatpush1.msra.mxu0 0.0
    %201 = vmatprep.subr.mxu0 0.0
    %202 = vmatpush1.msra.mxu0 0.0
    %203 = vmatprep.subr.mxu0 0.0
    %204 = vmatpush1.msra.mxu0 0.0
    %205 = vmatprep.subr.mxu0 0.0
    %206 = vmatpush1.msra.mxu0 0.0
    %207 = vmatprep.mubr.f32.mxu0 0.0
    %208 = vmatmul.mubr.f32.gmra.mrb[0].mxu0 %v138
    %v209 = vpop.f32.mrb[0].mxu0
    %v210 = vadd.f32 %v134, %v209
    %v211 = vpop.f32.mrb[0].mxu0
    %212 = vmatprep.mubr.f32.mxu0 0.0
    %213 = vmatmul.mubr.f32.gmra.mrb[0].mxu0 %v141
    %v214 = vpop.f32.mrb[0].mxu0
    %v215 = vadd.f32 %v135, %v214
    %v216 = vpop.f32.mrb[0].mxu0
    %217 = vdwg.mxu0
    %v218 = vld [vmem:[#allocation8] sm:$0xff]
    %v219 = vld [vmem:[#allocation8 + $0x8] sm:$0xff]
    %v220 = vld [vmem:[#allocation8 + $0x10] sm:$0xff]
    %v221 = vld [vmem:[#allocation8 + $0x18] sm:$0xff]
    %v222 = vld [vmem:[%s4] sm:$0x1]
    %v224 = vlaneseq
    %v225 = vshrl.u32 %v224, 7
    %v226 = vsub.s32 0, %v225
    %v227 = vrot.slane %v222, %v226
    %v230 = vsel %vm136, %v210, 0
    %v233 = vsel %vm136, %v215, 0
    %235 = vmatprep.subr.mxu0 0.0
    %236 = vmatpush1.msra.mxu0 %v218
    %237 = vmatprep.subr.mxu0 0.0
    %238 = vmatpush1.msra.mxu0 %v219
    %239 = vmatprep.subr.mxu0 0.0
    %240 = vmatpush1.msra.mxu0 %v220
    %241 = vmatprep.subr.mxu0 0.0
    %242 = vmatpush1.msra.mxu0 %v221
    %243 = vmatprep.subr.mxu0 0.0
    %244 = vmatpush1.msra.mxu0 0.0
    %245 = vmatprep.subr.mxu0 0.0
    %246 = vmatpush1.msra.mxu0 0.0
    %247 = vmatprep.subr.mxu0 0.0
    %248 = vmatpush1.msra.mxu0 0.0
    %249 = vmatprep.subr.mxu0 0.0
    %250 = vmatpush1.msra.mxu0 0.0
    %251 = vmatprep.subr.mxu0 0.0
    %252 = vmatpush1.msra.mxu0 0.0
    %253 = vmatprep.subr.mxu0 0.0
    %254 = vmatpush1.msra.mxu0 0.0
    %255 = vmatprep.subr.mxu0 0.0
    %256 = vmatpush1.msra.mxu0 0.0
    %257 = vmatprep.subr.mxu0 0.0
    %258 = vmatpush1.msra.mxu0 0.0
    %259 = vmatprep.subr.mxu0 0.0
    %260 = vmatpush1.msra.mxu0 0.0
    %261 = vmatprep.subr.mxu0 0.0
    %262 = vmatpush1.msra.mxu0 0.0
    %263 = vmatprep.subr.mxu0 0.0
    %264 = vmatpush1.msra.mxu0 0.0
    %265 = vmatprep.subr.mxu0 0.0
    %266 = vmatpush1.msra.mxu0 0.0
    %267 = vmatprep.subr.mxu0 0.0
    %268 = vmatpush1.msra.mxu0 0.0
    %269 = vmatprep.subr.mxu0 0.0
    %270 = vmatpush1.msra.mxu0 0.0
    %271 = vmatprep.subr.mxu0 0.0
    %272 = vmatpush1.msra.mxu0 0.0
    %273 = vmatprep.subr.mxu0 0.0
    %274 = vmatpush1.msra.mxu0 0.0
    %275 = vmatprep.subr.mxu0 0.0
    %276 = vmatpush1.msra.mxu0 0.0
    %277 = vmatprep.subr.mxu0 0.0
    %278 = vmatpush1.msra.mxu0 0.0
    %279 = vmatprep.subr.mxu0 0.0
    %280 = vmatpush1.msra.mxu0 0.0
    %281 = vmatprep.subr.mxu0 0.0
    %282 = vmatpush1.msra.mxu0 0.0
    %283 = vmatprep.subr.mxu0 0.0
    %284 = vmatpush1.msra.mxu0 0.0
    %285 = vmatprep.subr.mxu0 0.0
    %286 = vmatpush1.msra.mxu0 0.0
    %287 = vmatprep.subr.mxu0 0.0
    %288 = vmatpush1.msra.mxu0 0.0
    %289 = vmatprep.subr.mxu0 0.0
    %290 = vmatpush1.msra.mxu0 0.0
    %291 = vmatprep.subr.mxu0 0.0
    %292 = vmatpush1.msra.mxu0 0.0
    %293 = vmatprep.subr.mxu0 0.0
    %294 = vmatpush1.msra.mxu0 0.0
    %295 = vmatprep.subr.mxu0 0.0
    %296 = vmatpush1.msra.mxu0 0.0
    %297 = vmatprep.subr.mxu0 0.0
    %298 = vmatpush1.msra.mxu0 0.0
    %299 = vmatprep.mubr.f32.mxu0 0.0
    %300 = vmatmul.mubr.f32.gmra.mrb[0].mxu0 %v230
    %v301 = vpop.f32.mrb[0].mxu0
    %v302 = vadd.f32 %v227, %v301
    %v303 = vpop.f32.mrb[0].mxu0
    %304 = vmatprep.mubr.f32.mxu0 0.0
    %305 = vmatmul.mubr.f32.gmra.mrb[0].mxu0 %v233
    %v306 = vpop.f32.mrb[0].mxu0
    %v307 = vadd.f32 %v227, %v306
    %v308 = vpop.f32.mrb[0].mxu0
    %309 = vdwg.mxu0
    %v310 = vmul.f32 %v302, 0.35355338
    %v311 = vmul.f32 %v307, 0.35355338
    %313 = vrot.lane.b32.xlu0 %v302, 96
    %v314 = vpop.permute.xlu0 %313
    %vm315 = vcmask 64512
    %v317 = vsel %vm315, %v310, 0
    %v319 = vsel %vm315, %v314, 0
    %321 = vmatprep.subr.mxu0 0.0
    %322 = vmatpush1.xpose.msra.mxu0 %v319
    %323 = vmatprep.subr.mxu0 0.0
    %324 = vmatpush1.xpose.msra.mxu0 0.0
    %325 = vmatprep.subr.mxu0 0.0
    %326 = vmatpush1.xpose.msra.mxu0 0.0
    %327 = vmatprep.subr.mxu0 0.0
    %328 = vmatpush1.xpose.msra.mxu0 0.0
    %329 = vmatprep.subr.mxu0 0.0
    %330 = vmatpush1.xpose.msra.mxu0 0.0
    %331 = vmatprep.subr.mxu0 0.0
    %332 = vmatpush1.xpose.msra.mxu0 0.0
    %333 = vmatprep.subr.mxu0 0.0
    %334 = vmatpush1.xpose.msra.mxu0 0.0
    %335 = vmatprep.subr.mxu0 0.0
    %336 = vmatpush1.xpose.msra.mxu0 0.0
    %337 = vmatprep.subr.mxu0 0.0
    %338 = vmatpush1.xpose.msra.mxu0 0.0
    %339 = vmatprep.subr.mxu0 0.0
    %340 = vmatpush1.xpose.msra.mxu0 0.0
    %341 = vmatprep.subr.mxu0 0.0
    %342 = vmatpush1.xpose.msra.mxu0 0.0
    %343 = vmatprep.subr.mxu0 0.0
    %344 = vmatpush1.xpose.msra.mxu0 0.0
    %345 = vmatprep.subr.mxu0 0.0
    %346 = vmatpush1.xpose.msra.mxu0 0.0
    %347 = vmatprep.subr.mxu0 0.0
    %348 = vmatpush1.xpose.msra.mxu0 0.0
    %349 = vmatprep.subr.mxu0 0.0
    %350 = vmatpush1.xpose.msra.mxu0 0.0
    %351 = vmatprep.subr.mxu0 0.0
    %352 = vmatpush1.xpose.msra.mxu0 0.0
    %353 = vmatprep.subr.mxu0 0.0
    %354 = vmatpush1.xpose.msra.mxu0 0.0
    %355 = vmatprep.subr.mxu0 0.0
    %356 = vmatpush1.xpose.msra.mxu0 0.0
    %357 = vmatprep.subr.mxu0 0.0
    %358 = vmatpush1.xpose.msra.mxu0 0.0
    %359 = vmatprep.subr.mxu0 0.0
    %360 = vmatpush1.xpose.msra.mxu0 0.0
    %361 = vmatprep.subr.mxu0 0.0
    %362 = vmatpush1.xpose.msra.mxu0 0.0
    %363 = vmatprep.subr.mxu0 0.0
    %364 = vmatpush1.xpose.msra.mxu0 0.0
    %365 = vmatprep.subr.mxu0 0.0
    %366 = vmatpush1.xpose.msra.mxu0 0.0
    %367 = vmatprep.subr.mxu0 0.0
    %368 = vmatpush1.xpose.msra.mxu0 0.0
    %369 = vmatprep.subr.mxu0 0.0
    %370 = vmatpush1.xpose.msra.mxu0 0.0
    %371 = vmatprep.subr.mxu0 0.0
    %372 = vmatpush1.xpose.msra.mxu0 0.0
    %373 = vmatprep.subr.mxu0 0.0
    %374 = vmatpush1.xpose.msra.mxu0 0.0
    %375 = vmatprep.subr.mxu0 0.0
    %376 = vmatpush1.xpose.msra.mxu0 0.0
    %377 = vmatprep.subr.mxu0 0.0
    %378 = vmatpush1.xpose.msra.mxu0 0.0
    %379 = vmatprep.subr.mxu0 0.0
    %380 = vmatpush1.xpose.msra.mxu0 0.0
    %381 = vmatprep.subr.mxu0 0.0
    %382 = vmatpush1.xpose.msra.mxu0 0.0
    %383 = vmatprep.subr.mxu0 0.0
    %384 = vmatpush1.xpose.msra.mxu0 0.0
    %385 = vmatprep.mubr.f32.mxu0 0.0
    %386 = vmatmul.mubr.f32.gmra.mrb[0].mxu0 %v317
    %v387 = vpop.f32.mrb[0].mxu0
    %v388 = vadd.f32 0.0, %v387
    %v389 = vpop.f32.mrb[0].mxu0
    %390 = vdwg.mxu0
    %392 = vrot.lane.b32.xlu0 %v307, 96
    %v393 = vpop.permute.xlu0 %392
    %v395 = vsel %vm315, %v311, 0
    %v397 = vsel %vm315, %v393, 0
    %399 = vmatprep.subr.mxu0 0.0
    %400 = vmatpush1.xpose.msra.mxu0 %v397
    %401 = vmatprep.subr.mxu0 0.0
    %402 = vmatpush1.xpose.msra.mxu0 0.0
    %403 = vmatprep.subr.mxu0 0.0
    %404 = vmatpush1.xpose.msra.mxu0 0.0
    %405 = vmatprep.subr.mxu0 0.0
    %406 = vmatpush1.xpose.msra.mxu0 0.0
    %407 = vmatprep.subr.mxu0 0.0
    %408 = vmatpush1.xpose.msra.mxu0 0.0
    %409 = vmatprep.subr.mxu0 0.0
    %410 = vmatpush1.xpose.msra.mxu0 0.0
    %411 = vmatprep.subr.mxu0 0.0
    %412 = vmatpush1.xpose.msra.mxu0 0.0
    %413 = vmatprep.subr.mxu0 0.0
    %414 = vmatpush1.xpose.msra.mxu0 0.0
    %415 = vmatprep.subr.mxu0 0.0
    %416 = vmatpush1.xpose.msra.mxu0 0.0
    %417 = vmatprep.subr.mxu0 0.0
    %418 = vmatpush1.xpose.msra.mxu0 0.0
    %419 = vmatprep.subr.mxu0 0.0
    %420 = vmatpush1.xpose.msra.mxu0 0.0
    %421 = vmatprep.subr.mxu0 0.0
    %422 = vmatpush1.xpose.msra.mxu0 0.0
    %423 = vmatprep.subr.mxu0 0.0
    %424 = vmatpush1.xpose.msra.mxu0 0.0
    %425 = vmatprep.subr.mxu0 0.0
    %426 = vmatpush1.xpose.msra.mxu0 0.0
    %427 = vmatprep.subr.mxu0 0.0
    %428 = vmatpush1.xpose.msra.mxu0 0.0
    %429 = vmatprep.subr.mxu0 0.0
    %430 = vmatpush1.xpose.msra.mxu0 0.0
    %431 = vmatprep.subr.mxu0 0.0
    %432 = vmatpush1.xpose.msra.mxu0 0.0
    %433 = vmatprep.subr.mxu0 0.0
    %434 = vmatpush1.xpose.msra.mxu0 0.0
    %435 = vmatprep.subr.mxu0 0.0
    %436 = vmatpush1.xpose.msra.mxu0 0.0
    %437 = vmatprep.subr.mxu0 0.0
    %438 = vmatpush1.xpose.msra.mxu0 0.0
    %439 = vmatprep.subr.mxu0 0.0
    %440 = vmatpush1.xpose.msra.mxu0 0.0
    %441 = vmatprep.subr.mxu0 0.0
    %442 = vmatpush1.xpose.msra.mxu0 0.0
    %443 = vmatprep.subr.mxu0 0.0
    %444 = vmatpush1.xpose.msra.mxu0 0.0
    %445 = vmatprep.subr.mxu0 0.0
    %446 = vmatpush1.xpose.msra.mxu0 0.0
    %447 = vmatprep.subr.mxu0 0.0
    %448 = vmatpush1.xpose.msra.mxu0 0.0
    %449 = vmatprep.subr.mxu0 0.0
    %450 = vmatpush1.xpose.msra.mxu0 0.0
    %451 = vmatprep.subr.mxu0 0.0
    %452 = vmatpush1.xpose.msra.mxu0 0.0
    %453 = vmatprep.subr.mxu0 0.0
    %454 = vmatpush1.xpose.msra.mxu0 0.0
    %455 = vmatprep.subr.mxu0 0.0
    %456 = vmatpush1.xpose.msra.mxu0 0.0
    %457 = vmatprep.subr.mxu0 0.0
    %458 = vmatpush1.xpose.msra.mxu0 0.0
    %459 = vmatprep.subr.mxu0 0.0
    %460 = vmatpush1.xpose.msra.mxu0 0.0
    %461 = vmatprep.subr.mxu0 0.0
    %462 = vmatpush1.xpose.msra.mxu0 0.0
    %463 = vmatprep.mubr.f32.mxu0 0.0
    %464 = vmatmul.mubr.f32.gmra.mrb[0].mxu0 %v395
    %v465 = vpop.f32.mrb[0].mxu0
    %v466 = vadd.f32 0.0, %v465
    %v467 = vpop.f32.mrb[0].mxu0
    %468 = vdwg.mxu0
    %v469 = vsel %vm315, %v388, -inf
    %470 = vmax.xlane.f32.xlu0 %v469
    %v471 = vpop.xlane.xlu0 %470
    %v472 = vsel %vm315, %v466, -inf
    %473 = vmax.xlane.f32.xlu0 %v472
    %v474 = vpop.xlane.xlu0 %473
    %v475 = vsub.f32 %v388, %v471
    %v476 = vsub.f32 %v466, %v474
    %v477 = vmul.f32 %v475, 1.442695
    %v478 = vpow.pop %v477
    %v479 = vmul.f32 %v476, 1.442695
    %v480 = vpow.pop %v479
    %v481 = vsel %vm315, %v478, 0.0
    %482 = vadd.xlane.f32.xlu0 %v481
    %v483 = vpop.xlane.xlu0 %482
    %v484 = vsel %vm315, %v480, 0.0
    %485 = vadd.xlane.f32.xlu0 %v484
    %v486 = vpop.xlane.xlu0 %485
    %v487 = vrcp.pop %v483
    %v488 = vrcp.pop %v486
    %v489 = vmul.f32 %v478, %v487
    %v490 = vmul.f32 %v480, %v488
    %491 = vrot.lane.b32.xlu0 %v302, 64
    %v492 = vpop.permute.xlu0 %491
    %v495 = vsel %vm315, %v489, 0
    %497 = vmatprep.subr.mxu0 0.0
    %498 = vmatpush1.msra.mxu0 %v492
    %499 = vmatprep.subr.mxu0 0.0
    %500 = vmatpush1.msra.mxu0 0.0
    %501 = vmatprep.subr.mxu0 0.0
    %502 = vmatpush1.msra.mxu0 0.0
    %503 = vmatprep.subr.mxu0 0.0
    %504 = vmatpush1.msra.mxu0 0.0
    %505 = vmatprep.subr.mxu0 0.0
    %506 = vmatpush1.msra.mxu0 0.0
    %507 = vmatprep.subr.mxu0 0.0
    %508 = vmatpush1.msra.mxu0 0.0
    %509 = vmatprep.subr.mxu0 0.0
    %510 = vmatpush1.msra.mxu0 0.0
    %511 = vmatprep.subr.mxu0 0.0
    %512 = vmatpush1.msra.mxu0 0.0
    %513 = vmatprep.subr.mxu0 0.0
    %514 = vmatpush1.msra.mxu0 0.0
    %515 = vmatprep.subr.mxu0 0.0
    %516 = vmatpush1.msra.mxu0 0.0
    %517 = vmatprep.subr.mxu0 0.0
    %518 = vmatpush1.msra.mxu0 0.0
    %519 = vmatprep.subr.mxu0 0.0
    %520 = vmatpush1.msra.mxu0 0.0
    %521 = vmatprep.subr.mxu0 0.0
    %522 = vmatpush1.msra.mxu0 0.0
    %523 = vmatprep.subr.mxu0 0.0
    %524 = vmatpush1.msra.mxu0 0.0
    %525 = vmatprep.subr.mxu0 0.0
    %526 = vmatpush1.msra.mxu0 0.0
    %527 = vmatprep.subr.mxu0 0.0
    %528 = vmatpush1.msra.mxu0 0.0
    %529 = vmatprep.subr.mxu0 0.0
    %530 = vmatpush1.msra.mxu0 0.0
    %531 = vmatprep.subr.mxu0 0.0
    %532 = vmatpush1.msra.mxu0 0.0
    %533 = vmatprep.subr.mxu0 0.0
    %534 = vmatpush1.msra.mxu0 0.0
    %535 = vmatprep.subr.mxu0 0.0
    %536 = vmatpush1.msra.mxu0 0.0
    %537 = vmatprep.subr.mxu0 0.0
    %538 = vmatpush1.msra.mxu0 0.0
    %539 = vmatprep.subr.mxu0 0.0
    %540 = vmatpush1.msra.mxu0 0.0
    %541 = vmatprep.subr.mxu0 0.0
    %542 = vmatpush1.msra.mxu0 0.0
    %543 = vmatprep.subr.mxu0 0.0
    %544 = vmatpush1.msra.mxu0 0.0
    %545 = vmatprep.subr.mxu0 0.0
    %546 = vmatpush1.msra.mxu0 0.0
    %547 = vmatprep.subr.mxu0 0.0
    %548 = vmatpush1.msra.mxu0 0.0
    %549 = vmatprep.subr.mxu0 0.0
    %550 = vmatpush1.msra.mxu0 0.0
    %551 = vmatprep.subr.mxu0 0.0
    %552 = vmatpush1.msra.mxu0 0.0
    %553 = vmatprep.subr.mxu0 0.0
    %554 = vmatpush1.msra.mxu0 0.0
    %555 = vmatprep.subr.mxu0 0.0
    %556 = vmatpush1.msra.mxu0 0.0
    %557 = vmatprep.subr.mxu0 0.0
    %558 = vmatpush1.msra.mxu0 0.0
    %559 = vmatprep.subr.mxu0 0.0
    %560 = vmatpush1.msra.mxu0 0.0
    %561 = vmatprep.mubr.f32.mxu0 0.0
    %562 = vmatmul.mubr.f32.gmra.mrb[0].mxu0 %v495
    %v563 = vpop.f32.mrb[0].mxu0
    %v564 = vadd.f32 0.0, %v563
    %v565 = vpop.f32.mrb[0].mxu0
    %566 = vdwg.mxu0
    %567 = vrot.lane.b32.xlu0 %v307, 64
    %v568 = vpop.permute.xlu0 %567
    %v571 = vsel %vm315, %v490, 0
    %573 = vmatprep.subr.mxu0 0.0
    %574 = vmatpush1.msra.mxu0 %v568
    %575 = vmatprep.subr.mxu0 0.0
    %576 = vmatpush1.msra.mxu0 0.0
    %577 = vmatprep.subr.mxu0 0.0
    %578 = vmatpush1.msra.mxu0 0.0
    %579 = vmatprep.subr.mxu0 0.0
    %580 = vmatpush1.msra.mxu0 0.0
    %581 = vmatprep.subr.mxu0 0.0
    %582 = vmatpush1.msra.mxu0 0.0
    %583 = vmatprep.subr.mxu0 0.0
    %584 = vmatpush1.msra.mxu0 0.0
    %585 = vmatprep.subr.mxu0 0.0
    %586 = vmatpush1.msra.mxu0 0.0
    %587 = vmatprep.subr.mxu0 0.0
    %588 = vmatpush1.msra.mxu0 0.0
    %589 = vmatprep.subr.mxu0 0.0
    %590 = vmatpush1.msra.mxu0 0.0
    %591 = vmatprep.subr.mxu0 0.0
    %592 = vmatpush1.msra.mxu0 0.0
    %593 = vmatprep.subr.mxu0 0.0
    %594 = vmatpush1.msra.mxu0 0.0
    %595 = vmatprep.subr.mxu0 0.0
    %596 = vmatpush1.msra.mxu0 0.0
    %597 = vmatprep.subr.mxu0 0.0
    %598 = vmatpush1.msra.mxu0 0.0
    %599 = vmatprep.subr.mxu0 0.0
    %600 = vmatpush1.msra.mxu0 0.0
    %601 = vmatprep.subr.mxu0 0.0
    %602 = vmatpush1.msra.mxu0 0.0
    %603 = vmatprep.subr.mxu0 0.0
    %604 = vmatpush1.msra.mxu0 0.0
    %605 = vmatprep.subr.mxu0 0.0
    %606 = vmatpush1.msra.mxu0 0.0
    %607 = vmatprep.subr.mxu0 0.0
    %608 = vmatpush1.msra.mxu0 0.0
    %609 = vmatprep.subr.mxu0 0.0
    %610 = vmatpush1.msra.mxu0 0.0
    %611 = vmatprep.subr.mxu0 0.0
    %612 = vmatpush1.msra.mxu0 0.0
    %613 = vmatprep.subr.mxu0 0.0
    %614 = vmatpush1.msra.mxu0 0.0
    %615 = vmatprep.subr.mxu0 0.0
    %616 = vmatpush1.msra.mxu0 0.0
    %617 = vmatprep.subr.mxu0 0.0
    %618 = vmatpush1.msra.mxu0 0.0
    %619 = vmatprep.subr.mxu0 0.0
    %620 = vmatpush1.msra.mxu0 0.0
    %621 = vmatprep.subr.mxu0 0.0
    %622 = vmatpush1.msra.mxu0 0.0
    %623 = vmatprep.subr.mxu0 0.0
    %624 = vmatpush1.msra.mxu0 0.0
    %625 = vmatprep.subr.mxu0 0.0
    %626 = vmatpush1.msra.mxu0 0.0
    %627 = vmatprep.subr.mxu0 0.0
    %628 = vmatpush1.msra.mxu0 0.0
    %629 = vmatprep.subr.mxu0 0.0
    %630 = vmatpush1.msra.mxu0 0.0
    %631 = vmatprep.subr.mxu0 0.0
    %632 = vmatpush1.msra.mxu0 0.0
    %633 = vmatprep.subr.mxu0 0.0
    %634 = vmatpush1.msra.mxu0 0.0
    %635 = vmatprep.subr.mxu0 0.0
    %636 = vmatpush1.msra.mxu0 0.0
    %637 = vmatprep.mubr.f32.mxu0 0.0
    %638 = vmatmul.mubr.f32.gmra.mrb[0].mxu0 %v571
    %v639 = vpop.f32.mrb[0].mxu0
    %v640 = vadd.f32 0.0, %v639
    %v641 = vpop.f32.mrb[0].mxu0
    %642 = vdwg.mxu0
    %643 = vrot.lane.b32.xlu0 %v310, 120
    %v644 = vpop.permute.xlu0 %643
    %645 = vrot.lane.b32.xlu0 %v302, 88
    %v646 = vpop.permute.xlu0 %645
    %v647 = vsel %vm315, %v644, 0
    %v649 = vsel %vm315, %v646, 0
    %651 = vmatprep.subr.mxu0 0.0
    %652 = vmatpush1.xpose.msra.mxu0 %v649
    %653 = vmatprep.subr.mxu0 0.0
    %654 = vmatpush1.xpose.msra.mxu0 0.0
    %655 = vmatprep.subr.mxu0 0.0
    %656 = vmatpush1.xpose.msra.mxu0 0.0
    %657 = vmatprep.subr.mxu0 0.0
    %658 = vmatpush1.xpose.msra.mxu0 0.0
    %659 = vmatprep.subr.mxu0 0.0
    %660 = vmatpush1.xpose.msra.mxu0 0.0
    %661 = vmatprep.subr.mxu0 0.0
    %662 = vmatpush1.xpose.msra.mxu0 0.0
    %663 = vmatprep.subr.mxu0 0.0
    %664 = vmatpush1.xpose.msra.mxu0 0.0
    %665 = vmatprep.subr.mxu0 0.0
    %666 = vmatpush1.xpose.msra.mxu0 0.0
    %667 = vmatprep.subr.mxu0 0.0
    %668 = vmatpush1.xpose.msra.mxu0 0.0
    %669 = vmatprep.subr.mxu0 0.0
    %670 = vmatpush1.xpose.msra.mxu0 0.0
    %671 = vmatprep.subr.mxu0 0.0
    %672 = vmatpush1.xpose.msra.mxu0 0.0
    %673 = vmatprep.subr.mxu0 0.0
    %674 = vmatpush1.xpose.msra.mxu0 0.0
    %675 = vmatprep.subr.mxu0 0.0
    %676 = vmatpush1.xpose.msra.mxu0 0.0
    %677 = vmatprep.subr.mxu0 0.0
    %678 = vmatpush1.xpose.msra.mxu0 0.0
    %679 = vmatprep.subr.mxu0 0.0
    %680 = vmatpush1.xpose.msra.mxu0 0.0
    %681 = vmatprep.subr.mxu0 0.0
    %682 = vmatpush1.xpose.msra.mxu0 0.0
    %683 = vmatprep.subr.mxu0 0.0
    %684 = vmatpush1.xpose.msra.mxu0 0.0
    %685 = vmatprep.subr.mxu0 0.0
    %686 = vmatpush1.xpose.msra.mxu0 0.0
    %687 = vmatprep.subr.mxu0 0.0
    %688 = vmatpush1.xpose.msra.mxu0 0.0
    %689 = vmatprep.subr.mxu0 0.0
    %690 = vmatpush1.xpose.msra.mxu0 0.0
    %691 = vmatprep.subr.mxu0 0.0
    %692 = vmatpush1.xpose.msra.mxu0 0.0
    %693 = vmatprep.subr.mxu0 0.0
    %694 = vmatpush1.xpose.msra.mxu0 0.0
    %695 = vmatprep.subr.mxu0 0.0
    %696 = vmatpush1.xpose.msra.mxu0 0.0
    %697 = vmatprep.subr.mxu0 0.0
    %698 = vmatpush1.xpose.msra.mxu0 0.0
    %699 = vmatprep.subr.mxu0 0.0
    %700 = vmatpush1.xpose.msra.mxu0 0.0
    %701 = vmatprep.subr.mxu0 0.0
    %702 = vmatpush1.xpose.msra.mxu0 0.0
    %703 = vmatprep.subr.mxu0 0.0
    %704 = vmatpush1.xpose.msra.mxu0 0.0
    %705 = vmatprep.subr.mxu0 0.0
    %706 = vmatpush1.xpose.msra.mxu0 0.0
    %707 = vmatprep.subr.mxu0 0.0
    %708 = vmatpush1.xpose.msra.mxu0 0.0
    %709 = vmatprep.subr.mxu0 0.0
    %710 = vmatpush1.xpose.msra.mxu0 0.0
    %711 = vmatprep.subr.mxu0 0.0
    %712 = vmatpush1.xpose.msra.mxu0 0.0
    %713 = vmatprep.subr.mxu0 0.0
    %714 = vmatpush1.xpose.msra.mxu0 0.0
    %715 = vmatprep.mubr.f32.mxu0 0.0
    %716 = vmatmul.mubr.f32.gmra.mrb[0].mxu0 %v647
    %v717 = vpop.f32.mrb[0].mxu0
    %v718 = vadd.f32 0.0, %v717
    %v719 = vpop.f32.mrb[0].mxu0
    %720 = vdwg.mxu0
    %721 = vrot.lane.b32.xlu0 %v311, 120
    %v722 = vpop.permute.xlu0 %721
    %723 = vrot.lane.b32.xlu0 %v307, 88
    %v724 = vpop.permute.xlu0 %723
    %v725 = vsel %vm315, %v722, 0
    %v727 = vsel %vm315, %v724, 0
    %729 = vmatprep.subr.mxu0 0.0
    %730 = vmatpush1.xpose.msra.mxu0 %v727
    %731 = vmatprep.subr.mxu0 0.0
    %732 = vmatpush1.xpose.msra.mxu0 0.0
    %733 = vmatprep.subr.mxu0 0.0
    %734 = vmatpush1.xpose.msra.mxu0 0.0
    %735 = vmatprep.subr.mxu0 0.0
    %736 = vmatpush1.xpose.msra.mxu0 0.0
    %737 = vmatprep.subr.mxu0 0.0
    %738 = vmatpush1.xpose.msra.mxu0 0.0
    %739 = vmatprep.subr.mxu0 0.0
    %740 = vmatpush1.xpose.msra.mxu0 0.0
    %741 = vmatprep.subr.mxu0 0.0
    %742 = vmatpush1.xpose.msra.mxu0 0.0
    %743 = vmatprep.subr.mxu0 0.0
    %744 = vmatpush1.xpose.msra.mxu0 0.0
    %745 = vmatprep.subr.mxu0 0.0
    %746 = vmatpush1.xpose.msra.mxu0 0.0
    %747 = vmatprep.subr.mxu0 0.0
    %748 = vmatpush1.xpose.msra.mxu0 0.0
    %749 = vmatprep.subr.mxu0 0.0
    %750 = vmatpush1.xpose.msra.mxu0 0.0
    %751 = vmatprep.subr.mxu0 0.0
    %752 = vmatpush1.xpose.msra.mxu0 0.0
    %753 = vmatprep.subr.mxu0 0.0
    %754 = vmatpush1.xpose.msra.mxu0 0.0
    %755 = vmatprep.subr.mxu0 0.0
    %756 = vmatpush1.xpose.msra.mxu0 0.0
    %757 = vmatprep.subr.mxu0 0.0
    %758 = vmatpush1.xpose.msra.mxu0 0.0
    %759 = vmatprep.subr.mxu0 0.0
    %760 = vmatpush1.xpose.msra.mxu0 0.0
    %761 = vmatprep.subr.mxu0 0.0
    %762 = vmatpush1.xpose.msra.mxu0 0.0
    %763 = vmatprep.subr.mxu0 0.0
    %764 = vmatpush1.xpose.msra.mxu0 0.0
    %765 = vmatprep.subr.mxu0 0.0
    %766 = vmatpush1.xpose.msra.mxu0 0.0
    %767 = vmatprep.subr.mxu0 0.0
    %768 = vmatpush1.xpose.msra.mxu0 0.0
    %769 = vmatprep.subr.mxu0 0.0
    %770 = vmatpush1.xpose.msra.mxu0 0.0
    %771 = vmatprep.subr.mxu0 0.0
    %772 = vmatpush1.xpose.msra.mxu0 0.0
    %773 = vmatprep.subr.mxu0 0.0
    %774 = vmatpush1.xpose.msra.mxu0 0.0
    %775 = vmatprep.subr.mxu0 0.0
    %776 = vmatpush1.xpose.msra.mxu0 0.0
    %777 = vmatprep.subr.mxu0 0.0
    %778 = vmatpush1.xpose.msra.mxu0 0.0
    %779 = vmatprep.subr.mxu0 0.0
    %780 = vmatpush1.xpose.msra.mxu0 0.0
    %781 = vmatprep.subr.mxu0 0.0
    %782 = vmatpush1.xpose.msra.mxu0 0.0
    %783 = vmatprep.subr.mxu0 0.0
    %784 = vmatpush1.xpose.msra.mxu0 0.0
    %785 = vmatprep.subr.mxu0 0.0
    %786 = vmatpush1.xpose.msra.mxu0 0.0
    %787 = vmatprep.subr.mxu0 0.0
    %788 = vmatpush1.xpose.msra.mxu0 0.0
    %789 = vmatprep.subr.mxu0 0.0
    %790 = vmatpush1.xpose.msra.mxu0 0.0
    %791 = vmatprep.subr.mxu0 0.0
    %792 = vmatpush1.xpose.msra.mxu0 0.0
    %793 = vmatprep.mubr.f32.mxu0 0.0
    %794 = vmatmul.mubr.f32.gmra.mrb[0].mxu0 %v725
    %v795 = vpop.f32.mrb[0].mxu0
    %v796 = vadd.f32 0.0, %v795
    %v797 = vpop.f32.mrb[0].mxu0
    %798 = vdwg.mxu0
    %v799 = vsel %vm315, %v718, -inf
    %800 = vmax.xlane.f32.xlu0 %v799
    %v801 = vpop.xlane.xlu0 %800
    %v802 = vsel %vm315, %v796, -inf
    %803 = vmax.xlane.f32.xlu0 %v802
    %v804 = vpop.xlane.xlu0 %803
    %v805 = vsub.f32 %v718, %v801
    %v806 = vsub.f32 %v796, %v804
    %v807 = vmul.f32 %v805, 1.442695
    %v808 = vpow.pop %v807
    %v809 = vmul.f32 %v806, 1.442695
    %v810 = vpow.pop %v809
    %v811 = vsel %vm315, %v808, 0.0
    %812 = vadd.xlane.f32.xlu0 %v811
    %v813 = vpop.xlane.xlu0 %812
    %v814 = vsel %vm315, %v810, 0.0
    %815 = vadd.xlane.f32.xlu0 %v814
    %v816 = vpop.xlane.xlu0 %815
    %v817 = vrcp.pop %v813
    %v818 = vrcp.pop %v816
    %v819 = vmul.f32 %v808, %v817
    %v820 = vmul.f32 %v810, %v818
    %821 = vrot.lane.b32.xlu0 %v302, 56
    %v822 = vpop.permute.xlu0 %821
    %v825 = vsel %vm315, %v819, 0
    %827 = vmatprep.subr.mxu0 0.0
    %828 = vmatpush1.msra.mxu0 %v822
    %829 = vmatprep.subr.mxu0 0.0
    %830 = vmatpush1.msra.mxu0 0.0
    %831 = vmatprep.subr.mxu0 0.0
    %832 = vmatpush1.msra.mxu0 0.0
    %833 = vmatprep.subr.mxu0 0.0
    %834 = vmatpush1.msra.mxu0 0.0
    %835 = vmatprep.subr.mxu0 0.0
    %836 = vmatpush1.msra.mxu0 0.0
    %837 = vmatprep.subr.mxu0 0.0
    %838 = vmatpush1.msra.mxu0 0.0
    %839 = vmatprep.subr.mxu0 0.0
    %840 = vmatpush1.msra.mxu0 0.0
    %841 = vmatprep.subr.mxu0 0.0
    %842 = vmatpush1.msra.mxu0 0.0
    %843 = vmatprep.subr.mxu0 0.0
    %844 = vmatpush1.msra.mxu0 0.0
    %845 = vmatprep.subr.mxu0 0.0
    %846 = vmatpush1.msra.mxu0 0.0
    %847 = vmatprep.subr.mxu0 0.0
    %848 = vmatpush1.msra.mxu0 0.0
    %849 = vmatprep.subr.mxu0 0.0
    %850 = vmatpush1.msra.mxu0 0.0
    %851 = vmatprep.subr.mxu0 0.0
    %852 = vmatpush1.msra.mxu0 0.0
    %853 = vmatprep.subr.mxu0 0.0
    %854 = vmatpush1.msra.mxu0 0.0
    %855 = vmatprep.subr.mxu0 0.0
    %856 = vmatpush1.msra.mxu0 0.0
    %857 = vmatprep.subr.mxu0 0.0
    %858 = vmatpush1.msra.mxu0 0.0
    %859 = vmatprep.subr.mxu0 0.0
    %860 = vmatpush1.msra.mxu0 0.0
    %861 = vmatprep.subr.mxu0 0.0
    %862 = vmatpush1.msra.mxu0 0.0
    %863 = vmatprep.subr.mxu0 0.0
    %864 = vmatpush1.msra.mxu0 0.0
    %865 = vmatprep.subr.mxu0 0.0
    %866 = vmatpush1.msra.mxu0 0.0
    %867 = vmatprep.subr.mxu0 0.0
    %868 = vmatpush1.msra.mxu0 0.0
    %869 = vmatprep.subr.mxu0 0.0
    %870 = vmatpush1.msra.mxu0 0.0
    %871 = vmatprep.subr.mxu0 0.0
    %872 = vmatpush1.msra.mxu0 0.0
    %873 = vmatprep.subr.mxu0 0.0
    %874 = vmatpush1.msra.mxu0 0.0
    %875 = vmatprep.subr.mxu0 0.0
    %876 = vmatpush1.msra.mxu0 0.0
    %877 = vmatprep.subr.mxu0 0.0
    %878 = vmatpush1.msra.mxu0 0.0
    %879 = vmatprep.subr.mxu0 0.0
    %880 = vmatpush1.msra.mxu0 0.0
    %881 = vmatprep.subr.mxu0 0.0
    %882 = vmatpush1.msra.mxu0 0.0
    %883 = vmatprep.subr.mxu0 0.0
    %884 = vmatpush1.msra.mxu0 0.0
    %885 = vmatprep.subr.mxu0 0.0
    %886 = vmatpush1.msra.mxu0 0.0
    %887 = vmatprep.subr.mxu0 0.0
    %888 = vmatpush1.msra.mxu0 0.0
    %889 = vmatprep.subr.mxu0 0.0
    %890 = vmatpush1.msra.mxu0 0.0
    %891 = vmatprep.mubr.f32.mxu0 0.0
    %892 = vmatmul.mubr.f32.gmra.mrb[0].mxu0 %v825
    %v893 = vpop.f32.mrb[0].mxu0
    %v894 = vadd.f32 0.0, %v893
    %v895 = vpop.f32.mrb[0].mxu0
    %896 = vdwg.mxu0
    %897 = vrot.lane.b32.xlu0 %v307, 56
    %v898 = vpop.permute.xlu0 %897
    %v901 = vsel %vm315, %v820, 0
    %903 = vmatprep.subr.mxu0 0.0
    %904 = vmatpush1.msra.mxu0 %v898
    %905 = vmatprep.subr.mxu0 0.0
    %906 = vmatpush1.msra.mxu0 0.0
    %907 = vmatprep.subr.mxu0 0.0
    %908 = vmatpush1.msra.mxu0 0.0
    %909 = vmatprep.subr.mxu0 0.0
    %910 = vmatpush1.msra.mxu0 0.0
    %911 = vmatprep.subr.mxu0 0.0
    %912 = vmatpush1.msra.mxu0 0.0
    %913 = vmatprep.subr.mxu0 0.0
    %914 = vmatpush1.msra.mxu0 0.0
    %915 = vmatprep.subr.mxu0 0.0
    %916 = vmatpush1.msra.mxu0 0.0
    %917 = vmatprep.subr.mxu0 0.0
    %918 = vmatpush1.msra.mxu0 0.0
    %919 = vmatprep.subr.mxu0 0.0
    %920 = vmatpush1.msra.mxu0 0.0
    %921 = vmatprep.subr.mxu0 0.0
    %922 = vmatpush1.msra.mxu0 0.0
    %923 = vmatprep.subr.mxu0 0.0
    %924 = vmatpush1.msra.mxu0 0.0
    %925 = vmatprep.subr.mxu0 0.0
    %926 = vmatpush1.msra.mxu0 0.0
    %927 = vmatprep.subr.mxu0 0.0
    %928 = vmatpush1.msra.mxu0 0.0
    %929 = vmatprep.subr.mxu0 0.0
    %930 = vmatpush1.msra.mxu0 0.0
    %931 = vmatprep.subr.mxu0 0.0
    %932 = vmatpush1.msra.mxu0 0.0
    %933 = vmatprep.subr.mxu0 0.0
    %934 = vmatpush1.msra.mxu0 0.0
    %935 = vmatprep.subr.mxu0 0.0
    %936 = vmatpush1.msra.mxu0 0.0
    %937 = vmatprep.subr.mxu0 0.0
    %938 = vmatpush1.msra.mxu0 0.0
    %939 = vmatprep.subr.mxu0 0.0
    %940 = vmatpush1.msra.mxu0 0.0
    %941 = vmatprep.subr.mxu0 0.0
    %942 = vmatpush1.msra.mxu0 0.0
    %943 = vmatprep.subr.mxu0 0.0
    %944 = vmatpush1.msra.mxu0 0.0
    %945 = vmatprep.subr.mxu0 0.0
    %946 = vmatpush1.msra.mxu0 0.0
    %947 = vmatprep.subr.mxu0 0.0
    %948 = vmatpush1.msra.mxu0 0.0
    %949 = vmatprep.subr.mxu0 0.0
    %950 = vmatpush1.msra.mxu0 0.0
    %951 = vmatprep.subr.mxu0 0.0
    %952 = vmatpush1.msra.mxu0 0.0
    %953 = vmatprep.subr.mxu0 0.0
    %954 = vmatpush1.msra.mxu0 0.0
    %955 = vmatprep.subr.mxu0 0.0
    %956 = vmatpush1.msra.mxu0 0.0
    %957 = vmatprep.subr.mxu0 0.0
    %958 = vmatpush1.msra.mxu0 0.0
    %959 = vmatprep.subr.mxu0 0.0
    %960 = vmatpush1.msra.mxu0 0.0
    %961 = vmatprep.subr.mxu0 0.0
    %962 = vmatpush1.msra.mxu0 0.0
    %963 = vmatprep.subr.mxu0 0.0
    %964 = vmatpush1.msra.mxu0 0.0
    %965 = vmatprep.subr.mxu0 0.0
    %966 = vmatpush1.msra.mxu0 0.0
    %967 = vmatprep.mubr.f32.mxu0 0.0
    %968 = vmatmul.mubr.f32.gmra.mrb[0].mxu0 %v901
    %v969 = vpop.f32.mrb[0].mxu0
    %v970 = vadd.f32 0.0, %v969
    %v971 = vpop.f32.mrb[0].mxu0
    %972 = vdwg.mxu0
    %973 = vrot.lane.b32.xlu0 %v310, 112
    %v974 = vpop.permute.xlu0 %973
    %975 = vrot.lane.b32.xlu0 %v302, 80
    %v976 = vpop.permute.xlu0 %975
    %v977 = vsel %vm315, %v974, 0
    %v979 = vsel %vm315, %v976, 0
    %981 = vmatprep.subr.mxu0 0.0
    %982 = vmatpush1.xpose.msra.mxu0 %v979
    %983 = vmatprep.subr.mxu0 0.0
    %984 = vmatpush1.xpose.msra.mxu0 0.0
    %985 = vmatprep.subr.mxu0 0.0
    %986 = vmatpush1.xpose.msra.mxu0 0.0
    %987 = vmatprep.subr.mxu0 0.0
    %988 = vmatpush1.xpose.msra.mxu0 0.0
    %989 = vmatprep.subr.mxu0 0.0
    %990 = vmatpush1.xpose.msra.mxu0 0.0
    %991 = vmatprep.subr.mxu0 0.0
    %992 = vmatpush1.xpose.msra.mxu0 0.0
    %993 = vmatprep.subr.mxu0 0.0
    %994 = vmatpush1.xpose.msra.mxu0 0.0
    %995 = vmatprep.subr.mxu0 0.0
    %996 = vmatpush1.xpose.msra.mxu0 0.0
    %997 = vmatprep.subr.mxu0 0.0
    %998 = vmatpush1.xpose.msra.mxu0 0.0
    %999 = vmatprep.subr.mxu0 0.0
    %1000 = vmatpush1.xpose.msra.mxu0 0.0
    %1001 = vmatprep.subr.mxu0 0.0
    %1002 = vmatpush1.xpose.msra.mxu0 0.0
    %1003 = vmatprep.subr.mxu0 0.0
    %1004 = vmatpush1.xpose.msra.mxu0 0.0
    %1005 = vmatprep.subr.mxu0 0.0
    %1006 = vmatpush1.xpose.msra.mxu0 0.0
    %1007 = vmatprep.subr.mxu0 0.0
    %1008 = vmatpush1.xpose.msra.mxu0 0.0
    %1009 = vmatprep.subr.mxu0 0.0
    %1010 = vmatpush1.xpose.msra.mxu0 0.0
    %1011 = vmatprep.subr.mxu0 0.0
    %1012 = vmatpush1.xpose.msra.mxu0 0.0
    %1013 = vmatprep.subr.mxu0 0.0
    %1014 = vmatpush1.xpose.msra.mxu0 0.0
    %1015 = vmatprep.subr.mxu0 0.0
    %1016 = vmatpush1.xpose.msra.mxu0 0.0
    %1017 = vmatprep.subr.mxu0 0.0
    %1018 = vmatpush1.xpose.msra.mxu0 0.0
    %1019 = vmatprep.subr.mxu0 0.0
    %1020 = vmatpush1.xpose.msra.mxu0 0.0
    %1021 = vmatprep.subr.mxu0 0.0
    %1022 = vmatpush1.xpose.msra.mxu0 0.0
    %1023 = vmatprep.subr.mxu0 0.0
    %1024 = vmatpush1.xpose.msra.mxu0 0.0
    %1025 = vmatprep.subr.mxu0 0.0
    %1026 = vmatpush1.xpose.msra.mxu0 0.0
    %1027 = vmatprep.subr.mxu0 0.0
    %1028 = vmatpush1.xpose.msra.mxu0 0.0
    %1029 = vmatprep.subr.mxu0 0.0
    %1030 = vmatpush1.xpose.msra.mxu0 0.0
    %1031 = vmatprep.subr.mxu0 0.0
    %1032 = vmatpush1.xpose.msra.mxu0 0.0
    %1033 = vmatprep.subr.mxu0 0.0
    %1034 = vmatpush1.xpose.msra.mxu0 0.0
    %1035 = vmatprep.subr.mxu0 0.0
    %1036 = vmatpush1.xpose.msra.mxu0 0.0
    %1037 = vmatprep.subr.mxu0 0.0
    %1038 = vmatpush1.xpose.msra.mxu0 0.0
    %1039 = vmatprep.subr.mxu0 0.0
    %1040 = vmatpush1.xpose.msra.mxu0 0.0
    %1041 = vmatprep.subr.mxu0 0.0
    %1042 = vmatpush1.xpose.msra.mxu0 0.0
    %1043 = vmatprep.subr.mxu0 0.0
    %1044 = vmatpush1.xpose.msra.mxu0 0.0
    %1045 = vmatprep.mubr.f32.mxu0 0.0
    %1046 = vmatmul.mubr.f32.gmra.mrb[0].mxu0 %v977
    %v1047 = vpop.f32.mrb[0].mxu0
    %v1048 = vadd.f32 0.0, %v1047
    %v1049 = vpop.f32.mrb[0].mxu0
    %1050 = vdwg.mxu0
    %1051 = vrot.lane.b32.xlu0 %v311, 112
    %v1052 = vpop.permute.xlu0 %1051
    %1053 = vrot.lane.b32.xlu0 %v307, 80
    %v1054 = vpop.permute.xlu0 %1053
    %v1055 = vsel %vm315, %v1052, 0
    %v1057 = vsel %vm315, %v1054, 0
    %1059 = vmatprep.subr.mxu0 0.0
    %1060 = vmatpush1.xpose.msra.mxu0 %v1057
    %1061 = vmatprep.subr.mxu0 0.0
    %1062 = vmatpush1.xpose.msra.mxu0 0.0
    %1063 = vmatprep.subr.mxu0 0.0
    %1064 = vmatpush1.xpose.msra.mxu0 0.0
    %1065 = vmatprep.subr.mxu0 0.0
    %1066 = vmatpush1.xpose.msra.mxu0 0.0
    %1067 = vmatprep.subr.mxu0 0.0
    %1068 = vmatpush1.xpose.msra.mxu0 0.0
    %1069 = vmatprep.subr.mxu0 0.0
    %1070 = vmatpush1.xpose.msra.mxu0 0.0
    %1071 = vmatprep.subr.mxu0 0.0
    %1072 = vmatpush1.xpose.msra.mxu0 0.0
    %1073 = vmatprep.subr.mxu0 0.0
    %1074 = vmatpush1.xpose.msra.mxu0 0.0
    %1075 = vmatprep.subr.mxu0 0.0
    %1076 = vmatpush1.xpose.msra.mxu0 0.0
    %1077 = vmatprep.subr.mxu0 0.0
    %1078 = vmatpush1.xpose.msra.mxu0 0.0
    %1079 = vmatprep.subr.mxu0 0.0
    %1080 = vmatpush1.xpose.msra.mxu0 0.0
    %1081 = vmatprep.subr.mxu0 0.0
    %1082 = vmatpush1.xpose.msra.mxu0 0.0
    %1083 = vmatprep.subr.mxu0 0.0
    %1084 = vmatpush1.xpose.msra.mxu0 0.0
    %1085 = vmatprep.subr.mxu0 0.0
    %1086 = vmatpush1.xpose.msra.mxu0 0.0
    %1087 = vmatprep.subr.mxu0 0.0
    %1088 = vmatpush1.xpose.msra.mxu0 0.0
    %1089 = vmatprep.subr.mxu0 0.0
    %1090 = vmatpush1.xpose.msra.mxu0 0.0
    %1091 = vmatprep.subr.mxu0 0.0
    %1092 = vmatpush1.xpose.msra.mxu0 0.0
    %1093 = vmatprep.subr.mxu0 0.0
    %1094 = vmatpush1.xpose.msra.mxu0 0.0
    %1095 = vmatprep.subr.mxu0 0.0
    %1096 = vmatpush1.xpose.msra.mxu0 0.0
    %1097 = vmatprep.subr.mxu0 0.0
    %1098 = vmatpush1.xpose.msra.mxu0 0.0
    %1099 = vmatprep.subr.mxu0 0.0
    %1100 = vmatpush1.xpose.msra.mxu0 0.0
    %1101 = vmatprep.subr.mxu0 0.0
    %1102 = vmatpush1.xpose.msra.mxu0 0.0
    %1103 = vmatprep.subr.mxu0 0.0
    %1104 = vmatpush1.xpose.msra.mxu0 0.0
    %1105 = vmatprep.subr.mxu0 0.0
    %1106 = vmatpush1.xpose.msra.mxu0 0.0
    %1107 = vmatprep.subr.mxu0 0.0
    %1108 = vmatpush1.xpose.msra.mxu0 0.0
    %1109 = vmatprep.subr.mxu0 0.0
    %1110 = vmatpush1.xpose.msra.mxu0 0.0
    %1111 = vmatprep.subr.mxu0 0.0
    %1112 = vmatpush1.xpose.msra.mxu0 0.0
    %1113 = vmatprep.subr.mxu0 0.0
    %1114 = vmatpush1.xpose.msra.mxu0 0.0
    %1115 = vmatprep.subr.mxu0 0.0
    %1116 = vmatpush1.xpose.msra.mxu0 0.0
    %1117 = vmatprep.subr.mxu0 0.0
    %1118 = vmatpush1.xpose.msra.mxu0 0.0
    %1119 = vmatprep.subr.mxu0 0.0
    %1120 = vmatpush1.xpose.msra.mxu0 0.0
    %1121 = vmatprep.subr.mxu0 0.0
    %1122 = vmatpush1.xpose.msra.mxu0 0.0
    %1123 = vmatprep.mubr.f32.mxu0 0.0
    %1124 = vmatmul.mubr.f32.gmra.mrb[0].mxu0 %v1055
    %v1125 = vpop.f32.mrb[0].mxu0
    %v1126 = vadd.f32 0.0, %v1125
    %v1127 = vpop.f32.mrb[0].mxu0
    %1128 = vdwg.mxu0
    %v1129 = vsel %vm315, %v1048, -inf
    %1130 = vmax.xlane.f32.xlu0 %v1129
    %v1131 = vpop.xlane.xlu0 %1130
    %v1132 = vsel %vm315, %v1126, -inf
    %1133 = vmax.xlane.f32.xlu0 %v1132
    %v1134 = vpop.xlane.xlu0 %1133
    %v1135 = vsub.f32 %v1048, %v1131
    %v1136 = vsub.f32 %v1126, %v1134
    %v1137 = vmul.f32 %v1135, 1.442695
    %v1138 = vpow.pop %v1137
    %v1139 = vmul.f32 %v1136, 1.442695
    %v1140 = vpow.pop %v1139
    %v1141 = vsel %vm315, %v1138, 0.0
    %1142 = vadd.xlane.f32.xlu0 %v1141
    %v1143 = vpop.xlane.xlu0 %1142
    %v1144 = vsel %vm315, %v1140, 0.0
    %1145 = vadd.xlane.f32.xlu0 %v1144
    %v1146 = vpop.xlane.xlu0 %1145
    %v1147 = vrcp.pop %v1143
    %v1148 = vrcp.pop %v1146
    %v1149 = vmul.f32 %v1138, %v1147
    %v1150 = vmul.f32 %v1140, %v1148
    %1151 = vrot.lane.b32.xlu0 %v302, 48
    %v1152 = vpop.permute.xlu0 %1151
    %v1155 = vsel %vm315, %v1149, 0
    %1157 = vmatprep.subr.mxu0 0.0
    %1158 = vmatpush1.msra.mxu0 %v1152
    %1159 = vmatprep.subr.mxu0 0.0
    %1160 = vmatpush1.msra.mxu0 0.0
    %1161 = vmatprep.subr.mxu0 0.0
    %1162 = vmatpush1.msra.mxu0 0.0
    %1163 = vmatprep.subr.mxu0 0.0
    %1164 = vmatpush1.msra.mxu0 0.0
    %1165 = vmatprep.subr.mxu0 0.0
    %1166 = vmatpush1.msra.mxu0 0.0
    %1167 = vmatprep.subr.mxu0 0.0
    %1168 = vmatpush1.msra.mxu0 0.0
    %1169 = vmatprep.subr.mxu0 0.0
    %1170 = vmatpush1.msra.mxu0 0.0
    %1171 = vmatprep.subr.mxu0 0.0
    %1172 = vmatpush1.msra.mxu0 0.0
    %1173 = vmatprep.subr.mxu0 0.0
    %1174 = vmatpush1.msra.mxu0 0.0
    %1175 = vmatprep.subr.mxu0 0.0
    %1176 = vmatpush1.msra.mxu0 0.0
    %1177 = vmatprep.subr.mxu0 0.0
    %1178 = vmatpush1.msra.mxu0 0.0
    %1179 = vmatprep.subr.mxu0 0.0
    %1180 = vmatpush1.msra.mxu0 0.0
    %1181 = vmatprep.subr.mxu0 0.0
    %1182 = vmatpush1.msra.mxu0 0.0
    %1183 = vmatprep.subr.mxu0 0.0
    %1184 = vmatpush1.msra.mxu0 0.0
    %1185 = vmatprep.subr.mxu0 0.0
    %1186 = vmatpush1.msra.mxu0 0.0
    %1187 = vmatprep.subr.mxu0 0.0
    %1188 = vmatpush1.msra.mxu0 0.0
    %1189 = vmatprep.subr.mxu0 0.0
    %1190 = vmatpush1.msra.mxu0 0.0
    %1191 = vmatprep.subr.mxu0 0.0
    %1192 = vmatpush1.msra.mxu0 0.0
    %1193 = vmatprep.subr.mxu0 0.0
    %1194 = vmatpush1.msra.mxu0 0.0
    %1195 = vmatprep.subr.mxu0 0.0
    %1196 = vmatpush1.msra.mxu0 0.0
    %1197 = vmatprep.subr.mxu0 0.0
    %1198 = vmatpush1.msra.mxu0 0.0
    %1199 = vmatprep.subr.mxu0 0.0
    %1200 = vmatpush1.msra.mxu0 0.0
    %1201 = vmatprep.subr.mxu0 0.0
    %1202 = vmatpush1.msra.mxu0 0.0
    %1203 = vmatprep.subr.mxu0 0.0
    %1204 = vmatpush1.msra.mxu0 0.0
    %1205 = vmatprep.subr.mxu0 0.0
    %1206 = vmatpush1.msra.mxu0 0.0
    %1207 = vmatprep.subr.mxu0 0.0
    %1208 = vmatpush1.msra.mxu0 0.0
    %1209 = vmatprep.subr.mxu0 0.0
    %1210 = vmatpush1.msra.mxu0 0.0
    %1211 = vmatprep.subr.mxu0 0.0
    %1212 = vmatpush1.msra.mxu0 0.0
    %1213 = vmatprep.subr.mxu0 0.0
    %1214 = vmatpush1.msra.mxu0 0.0
    %1215 = vmatprep.subr.mxu0 0.0
    %1216 = vmatpush1.msra.mxu0 0.0
    %1217 = vmatprep.subr.mxu0 0.0
    %1218 = vmatpush1.msra.mxu0 0.0
    %1219 = vmatprep.subr.mxu0 0.0
    %1220 = vmatpush1.msra.mxu0 0.0
    %1221 = vmatprep.mubr.f32.mxu0 0.0
    %1222 = vmatmul.mubr.f32.gmra.mrb[0].mxu0 %v1155
    %v1223 = vpop.f32.mrb[0].mxu0
    %v1224 = vadd.f32 0.0, %v1223
    %v1225 = vpop.f32.mrb[0].mxu0
    %1226 = vdwg.mxu0
    %1227 = vrot.lane.b32.xlu0 %v307, 48
    %v1228 = vpop.permute.xlu0 %1227
    %v1231 = vsel %vm315, %v1150, 0
    %1233 = vmatprep.subr.mxu0 0.0
    %1234 = vmatpush1.msra.mxu0 %v1228
    %1235 = vmatprep.subr.mxu0 0.0
    %1236 = vmatpush1.msra.mxu0 0.0
    %1237 = vmatprep.subr.mxu0 0.0
    %1238 = vmatpush1.msra.mxu0 0.0
    %1239 = vmatprep.subr.mxu0 0.0
    %1240 = vmatpush1.msra.mxu0 0.0
    %1241 = vmatprep.subr.mxu0 0.0
    %1242 = vmatpush1.msra.mxu0 0.0
    %1243 = vmatprep.subr.mxu0 0.0
    %1244 = vmatpush1.msra.mxu0 0.0
    %1245 = vmatprep.subr.mxu0 0.0
    %1246 = vmatpush1.msra.mxu0 0.0
    %1247 = vmatprep.subr.mxu0 0.0
    %1248 = vmatpush1.msra.mxu0 0.0
    %1249 = vmatprep.subr.mxu0 0.0
    %1250 = vmatpush1.msra.mxu0 0.0
    %1251 = vmatprep.subr.mxu0 0.0
    %1252 = vmatpush1.msra.mxu0 0.0
    %1253 = vmatprep.subr.mxu0 0.0
    %1254 = vmatpush1.msra.mxu0 0.0
    %1255 = vmatprep.subr.mxu0 0.0
    %1256 = vmatpush1.msra.mxu0 0.0
    %1257 = vmatprep.subr.mxu0 0.0
    %1258 = vmatpush1.msra.mxu0 0.0
    %1259 = vmatprep.subr.mxu0 0.0
    %1260 = vmatpush1.msra.mxu0 0.0
    %1261 = vmatprep.subr.mxu0 0.0
    %1262 = vmatpush1.msra.mxu0 0.0
    %1263 = vmatprep.subr.mxu0 0.0
    %1264 = vmatpush1.msra.mxu0 0.0
    %1265 = vmatprep.subr.mxu0 0.0
    %1266 = vmatpush1.msra.mxu0 0.0
    %1267 = vmatprep.subr.mxu0 0.0
    %1268 = vmatpush1.msra.mxu0 0.0
    %1269 = vmatprep.subr.mxu0 0.0
    %1270 = vmatpush1.msra.mxu0 0.0
    %1271 = vmatprep.subr.mxu0 0.0
    %1272 = vmatpush1.msra.mxu0 0.0
    %1273 = vmatprep.subr.mxu0 0.0
    %1274 = vmatpush1.msra.mxu0 0.0
    %1275 = vmatprep.subr.mxu0 0.0
    %1276 = vmatpush1.msra.mxu0 0.0
    %1277 = vmatprep.subr.mxu0 0.0
    %1278 = vmatpush1.msra.mxu0 0.0
    %1279 = vmatprep.subr.mxu0 0.0
    %1280 = vmatpush1.msra.mxu0 0.0
    %1281 = vmatprep.subr.mxu0 0.0
    %1282 = vmatpush1.msra.mxu0 0.0
    %1283 = vmatprep.subr.mxu0 0.0
    %1284 = vmatpush1.msra.mxu0 0.0
    %1285 = vmatprep.subr.mxu0 0.0
    %1286 = vmatpush1.msra.mxu0 0.0
    %1287 = vmatprep.subr.mxu0 0.0
    %1288 = vmatpush1.msra.mxu0 0.0
    %1289 = vmatprep.subr.mxu0 0.0
    %1290 = vmatpush1.msra.mxu0 0.0
    %1291 = vmatprep.subr.mxu0 0.0
    %1292 = vmatpush1.msra.mxu0 0.0
    %1293 = vmatprep.subr.mxu0 0.0
    %1294 = vmatpush1.msra.mxu0 0.0
    %1295 = vmatprep.subr.mxu0 0.0
    %1296 = vmatpush1.msra.mxu0 0.0
    %1297 = vmatprep.mubr.f32.mxu0 0.0
    %1298 = vmatmul.mubr.f32.gmra.mrb[0].mxu0 %v1231
    %v1299 = vpop.f32.mrb[0].mxu0
    %v1300 = vadd.f32 0.0, %v1299
    %v1301 = vpop.f32.mrb[0].mxu0
    %1302 = vdwg.mxu0
    %1303 = vrot.lane.b32.xlu0 %v310, 104
    %v1304 = vpop.permute.xlu0 %1303
    %1305 = vrot.lane.b32.xlu0 %v302, 72
    %v1306 = vpop.permute.xlu0 %1305
    %v1307 = vsel %vm315, %v1304, 0
    %v1309 = vsel %vm315, %v1306, 0
    %1311 = vmatprep.subr.mxu0 0.0
    %1312 = vmatpush1.xpose.msra.mxu0 %v1309
    %1313 = vmatprep.subr.mxu0 0.0
    %1314 = vmatpush1.xpose.msra.mxu0 0.0
    %1315 = vmatprep.subr.mxu0 0.0
    %1316 = vmatpush1.xpose.msra.mxu0 0.0
    %1317 = vmatprep.subr.mxu0 0.0
    %1318 = vmatpush1.xpose.msra.mxu0 0.0
    %1319 = vmatprep.subr.mxu0 0.0
    %1320 = vmatpush1.xpose.msra.mxu0 0.0
    %1321 = vmatprep.subr.mxu0 0.0
    %1322 = vmatpush1.xpose.msra.mxu0 0.0
    %1323 = vmatprep.subr.mxu0 0.0
    %1324 = vmatpush1.xpose.msra.mxu0 0.0
    %1325 = vmatprep.subr.mxu0 0.0
    %1326 = vmatpush1.xpose.msra.mxu0 0.0
    %1327 = vmatprep.subr.mxu0 0.0
    %1328 = vmatpush1.xpose.msra.mxu0 0.0
    %1329 = vmatprep.subr.mxu0 0.0
    %1330 = vmatpush1.xpose.msra.mxu0 0.0
    %1331 = vmatprep.subr.mxu0 0.0
    %1332 = vmatpush1.xpose.msra.mxu0 0.0
    %1333 = vmatprep.subr.mxu0 0.0
    %1334 = vmatpush1.xpose.msra.mxu0 0.0
    %1335 = vmatprep.subr.mxu0 0.0
    %1336 = vmatpush1.xpose.msra.mxu0 0.0
    %1337 = vmatprep.subr.mxu0 0.0
    %1338 = vmatpush1.xpose.msra.mxu0 0.0
    %1339 = vmatprep.subr.mxu0 0.0
    %1340 = vmatpush1.xpose.msra.mxu0 0.0
    %1341 = vmatprep.subr.mxu0 0.0
    %1342 = vmatpush1.xpose.msra.mxu0 0.0
    %1343 = vmatprep.subr.mxu0 0.0
    %1344 = vmatpush1.xpose.msra.mxu0 0.0
    %1345 = vmatprep.subr.mxu0 0.0
    %1346 = vmatpush1.xpose.msra.mxu0 0.0
    %1347 = vmatprep.subr.mxu0 0.0
    %1348 = vmatpush1.xpose.msra.mxu0 0.0
    %1349 = vmatprep.subr.mxu0 0.0
    %1350 = vmatpush1.xpose.msra.mxu0 0.0
    %1351 = vmatprep.subr.mxu0 0.0
    %1352 = vmatpush1.xpose.msra.mxu0 0.0
    %1353 = vmatprep.subr.mxu0 0.0
    %1354 = vmatpush1.xpose.msra.mxu0 0.0
    %1355 = vmatprep.subr.mxu0 0.0
    %1356 = vmatpush1.xpose.msra.mxu0 0.0
    %1357 = vmatprep.subr.mxu0 0.0
    %1358 = vmatpush1.xpose.msra.mxu0 0.0
    %1359 = vmatprep.subr.mxu0 0.0
    %1360 = vmatpush1.xpose.msra.mxu0 0.0
    %1361 = vmatprep.subr.mxu0 0.0
    %1362 = vmatpush1.xpose.msra.mxu0 0.0
    %1363 = vmatprep.subr.mxu0 0.0
    %1364 = vmatpush1.xpose.msra.mxu0 0.0
    %1365 = vmatprep.subr.mxu0 0.0
    %1366 = vmatpush1.xpose.msra.mxu0 0.0
    %1367 = vmatprep.subr.mxu0 0.0
    %1368 = vmatpush1.xpose.msra.mxu0 0.0
    %1369 = vmatprep.subr.mxu0 0.0
    %1370 = vmatpush1.xpose.msra.mxu0 0.0
    %1371 = vmatprep.subr.mxu0 0.0
    %1372 = vmatpush1.xpose.msra.mxu0 0.0
    %1373 = vmatprep.subr.mxu0 0.0
    %1374 = vmatpush1.xpose.msra.mxu0 0.0
    %1375 = vmatprep.mubr.f32.mxu0 0.0
    %1376 = vmatmul.mubr.f32.gmra.mrb[0].mxu0 %v1307
    %v1377 = vpop.f32.mrb[0].mxu0
    %v1378 = vadd.f32 0.0, %v1377
    %v1379 = vpop.f32.mrb[0].mxu0
    %1380 = vdwg.mxu0
    %1381 = vrot.lane.b32.xlu0 %v311, 104
    %v1382 = vpop.permute.xlu0 %1381
    %1383 = vrot.lane.b32.xlu0 %v307, 72
    %v1384 = vpop.permute.xlu0 %1383
    %v1385 = vsel %vm315, %v1382, 0
    %v1387 = vsel %vm315, %v1384, 0
    %1389 = vmatprep.subr.mxu0 0.0
    %1390 = vmatpush1.xpose.msra.mxu0 %v1387
    %1391 = vmatprep.subr.mxu0 0.0
    %1392 = vmatpush1.xpose.msra.mxu0 0.0
    %1393 = vmatprep.subr.mxu0 0.0
    %1394 = vmatpush1.xpose.msra.mxu0 0.0
    %1395 = vmatprep.subr.mxu0 0.0
    %1396 = vmatpush1.xpose.msra.mxu0 0.0
    %1397 = vmatprep.subr.mxu0 0.0
    %1398 = vmatpush1.xpose.msra.mxu0 0.0
    %1399 = vmatprep.subr.mxu0 0.0
    %1400 = vmatpush1.xpose.msra.mxu0 0.0
    %1401 = vmatprep.subr.mxu0 0.0
    %1402 = vmatpush1.xpose.msra.mxu0 0.0
    %1403 = vmatprep.subr.mxu0 0.0
    %1404 = vmatpush1.xpose.msra.mxu0 0.0
    %1405 = vmatprep.subr.mxu0 0.0
    %1406 = vmatpush1.xpose.msra.mxu0 0.0
    %1407 = vmatprep.subr.mxu0 0.0
    %1408 = vmatpush1.xpose.msra.mxu0 0.0
    %1409 = vmatprep.subr.mxu0 0.0
    %1410 = vmatpush1.xpose.msra.mxu0 0.0
    %1411 = vmatprep.subr.mxu0 0.0
    %1412 = vmatpush1.xpose.msra.mxu0 0.0
    %1413 = vmatprep.subr.mxu0 0.0
    %1414 = vmatpush1.xpose.msra.mxu0 0.0
    %1415 = vmatprep.subr.mxu0 0.0
    %1416 = vmatpush1.xpose.msra.mxu0 0.0
    %1417 = vmatprep.subr.mxu0 0.0
    %1418 = vmatpush1.xpose.msra.mxu0 0.0
    %1419 = vmatprep.subr.mxu0 0.0
    %1420 = vmatpush1.xpose.msra.mxu0 0.0
    %1421 = vmatprep.subr.mxu0 0.0
    %1422 = vmatpush1.xpose.msra.mxu0 0.0
    %1423 = vmatprep.subr.mxu0 0.0
    %1424 = vmatpush1.xpose.msra.mxu0 0.0
    %1425 = vmatprep.subr.mxu0 0.0
    %1426 = vmatpush1.xpose.msra.mxu0 0.0
    %1427 = vmatprep.subr.mxu0 0.0
    %1428 = vmatpush1.xpose.msra.mxu0 0.0
    %1429 = vmatprep.subr.mxu0 0.0
    %1430 = vmatpush1.xpose.msra.mxu0 0.0
    %1431 = vmatprep.subr.mxu0 0.0
    %1432 = vmatpush1.xpose.msra.mxu0 0.0
    %1433 = vmatprep.subr.mxu0 0.0
    %1434 = vmatpush1.xpose.msra.mxu0 0.0
    %1435 = vmatprep.subr.mxu0 0.0
    %1436 = vmatpush1.xpose.msra.mxu0 0.0
    %1437 = vmatprep.subr.mxu0 0.0
    %1438 = vmatpush1.xpose.msra.mxu0 0.0
    %1439 = vmatprep.subr.mxu0 0.0
    %1440 = vmatpush1.xpose.msra.mxu0 0.0
    %1441 = vmatprep.subr.mxu0 0.0
    %1442 = vmatpush1.xpose.msra.mxu0 0.0
    %1443 = vmatprep.subr.mxu0 0.0
    %1444 = vmatpush1.xpose.msra.mxu0 0.0
    %1445 = vmatprep.subr.mxu0 0.0
    %1446 = vmatpush1.xpose.msra.mxu0 0.0
    %1447 = vmatprep.subr.mxu0 0.0
    %1448 = vmatpush1.xpose.msra.mxu0 0.0
    %1449 = vmatprep.subr.mxu0 0.0
    %1450 = vmatpush1.xpose.msra.mxu0 0.0
    %1451 = vmatprep.subr.mxu0 0.0
    %1452 = vmatpush1.xpose.msra.mxu0 0.0
    %1453 = vmatprep.mubr.f32.mxu0 0.0
    %1454 = vmatmul.mubr.f32.gmra.mrb[0].mxu0 %v1385
    %v1455 = vpop.f32.mrb[0].mxu0
    %v1456 = vadd.f32 0.0, %v1455
    %v1457 = vpop.f32.mrb[0].mxu0
    %1458 = vdwg.mxu0
    %v1459 = vsel %vm315, %v1378, -inf
    %1460 = vmax.xlane.f32.xlu0 %v1459
    %v1461 = vpop.xlane.xlu0 %1460
    %v1462 = vsel %vm315, %v1456, -inf
    %1463 = vmax.xlane.f32.xlu0 %v1462
    %v1464 = vpop.xlane.xlu0 %1463
    %v1465 = vsub.f32 %v1378, %v1461
    %v1466 = vsub.f32 %v1456, %v1464
    %v1467 = vmul.f32 %v1465, 1.442695
    %v1468 = vpow.pop %v1467
    %v1469 = vmul.f32 %v1466, 1.442695
    %v1470 = vpow.pop %v1469
    %v1471 = vsel %vm315, %v1468, 0.0
    %1472 = vadd.xlane.f32.xlu0 %v1471
    %v1473 = vpop.xlane.xlu0 %1472
    %v1474 = vsel %vm315, %v1470, 0.0
    %1475 = vadd.xlane.f32.xlu0 %v1474
    %v1476 = vpop.xlane.xlu0 %1475
    %v1477 = vrcp.pop %v1473
    %v1478 = vrcp.pop %v1476
    %v1479 = vmul.f32 %v1468, %v1477
    %v1480 = vmul.f32 %v1470, %v1478
    %1481 = vrot.lane.b32.xlu0 %v302, 40
    %v1482 = vpop.permute.xlu0 %1481
    %v1485 = vsel %vm315, %v1479, 0
    %1487 = vmatprep.subr.mxu0 0.0
    %1488 = vmatpush1.msra.mxu0 %v1482
    %1489 = vmatprep.subr.mxu0 0.0
    %1490 = vmatpush1.msra.mxu0 0.0
    %1491 = vmatprep.subr.mxu0 0.0
    %1492 = vmatpush1.msra.mxu0 0.0
    %1493 = vmatprep.subr.mxu0 0.0
    %1494 = vmatpush1.msra.mxu0 0.0
    %1495 = vmatprep.subr.mxu0 0.0
    %1496 = vmatpush1.msra.mxu0 0.0
    %1497 = vmatprep.subr.mxu0 0.0
    %1498 = vmatpush1.msra.mxu0 0.0
    %1499 = vmatprep.subr.mxu0 0.0
    %1500 = vmatpush1.msra.mxu0 0.0
    %1501 = vmatprep.subr.mxu0 0.0
    %1502 = vmatpush1.msra.mxu0 0.0
    %1503 = vmatprep.subr.mxu0 0.0
    %1504 = vmatpush1.msra.mxu0 0.0
    %1505 = vmatprep.subr.mxu0 0.0
    %1506 = vmatpush1.msra.mxu0 0.0
    %1507 = vmatprep.subr.mxu0 0.0
    %1508 = vmatpush1.msra.mxu0 0.0
    %1509 = vmatprep.subr.mxu0 0.0
    %1510 = vmatpush1.msra.mxu0 0.0
    %1511 = vmatprep.subr.mxu0 0.0
    %1512 = vmatpush1.msra.mxu0 0.0
    %1513 = vmatprep.subr.mxu0 0.0
    %1514 = vmatpush1.msra.mxu0 0.0
    %1515 = vmatprep.subr.mxu0 0.0
    %1516 = vmatpush1.msra.mxu0 0.0
    %1517 = vmatprep.subr.mxu0 0.0
    %1518 = vmatpush1.msra.mxu0 0.0
    %1519 = vmatprep.subr.mxu0 0.0
    %1520 = vmatpush1.msra.mxu0 0.0
    %1521 = vmatprep.subr.mxu0 0.0
    %1522 = vmatpush1.msra.mxu0 0.0
    %1523 = vmatprep.subr.mxu0 0.0
    %1524 = vmatpush1.msra.mxu0 0.0
    %1525 = vmatprep.subr.mxu0 0.0
    %1526 = vmatpush1.msra.mxu0 0.0
    %1527 = vmatprep.subr.mxu0 0.0
    %1528 = vmatpush1.msra.mxu0 0.0
    %1529 = vmatprep.subr.mxu0 0.0
    %1530 = vmatpush1.msra.mxu0 0.0
    %1531 = vmatprep.subr.mxu0 0.0
    %1532 = vmatpush1.msra.mxu0 0.0
    %1533 = vmatprep.subr.mxu0 0.0
    %1534 = vmatpush1.msra.mxu0 0.0
    %1535 = vmatprep.subr.mxu0 0.0
    %1536 = vmatpush1.msra.mxu0 0.0
    %1537 = vmatprep.subr.mxu0 0.0
    %1538 = vmatpush1.msra.mxu0 0.0
    %1539 = vmatprep.subr.mxu0 0.0
    %1540 = vmatpush1.msra.mxu0 0.0
    %1541 = vmatprep.subr.mxu0 0.0
    %1542 = vmatpush1.msra.mxu0 0.0
    %1543 = vmatprep.subr.mxu0 0.0
    %1544 = vmatpush1.msra.mxu0 0.0
    %1545 = vmatprep.subr.mxu0 0.0
    %1546 = vmatpush1.msra.mxu0 0.0
    %1547 = vmatprep.subr.mxu0 0.0
    %1548 = vmatpush1.msra.mxu0 0.0
    %1549 = vmatprep.subr.mxu0 0.0
    %1550 = vmatpush1.msra.mxu0 0.0
    %1551 = vmatprep.mubr.f32.mxu0 0.0
    %1552 = vmatmul.mubr.f32.gmra.mrb[0].mxu0 %v1485
    %v1553 = vpop.f32.mrb[0].mxu0
    %v1554 = vadd.f32 0.0, %v1553
    %v1555 = vpop.f32.mrb[0].mxu0
    %1556 = vdwg.mxu0
    %1557 = vrot.lane.b32.xlu0 %v307, 40
    %v1558 = vpop.permute.xlu0 %1557
    %v1561 = vsel %vm315, %v1480, 0
    %1563 = vmatprep.subr.mxu0 0.0
    %1564 = vmatpush1.msra.mxu0 %v1558
    %1565 = vmatprep.subr.mxu0 0.0
    %1566 = vmatpush1.msra.mxu0 0.0
    %1567 = vmatprep.subr.mxu0 0.0
    %1568 = vmatpush1.msra.mxu0 0.0
    %1569 = vmatprep.subr.mxu0 0.0
    %1570 = vmatpush1.msra.mxu0 0.0
    %1571 = vmatprep.subr.mxu0 0.0
    %1572 = vmatpush1.msra.mxu0 0.0
    %1573 = vmatprep.subr.mxu0 0.0
    %1574 = vmatpush1.msra.mxu0 0.0
    %1575 = vmatprep.subr.mxu0 0.0
    %1576 = vmatpush1.msra.mxu0 0.0
    %1577 = vmatprep.subr.mxu0 0.0
    %1578 = vmatpush1.msra.mxu0 0.0
    %1579 = vmatprep.subr.mxu0 0.0
    %1580 = vmatpush1.msra.mxu0 0.0
    %1581 = vmatprep.subr.mxu0 0.0
    %1582 = vmatpush1.msra.mxu0 0.0
    %1583 = vmatprep.subr.mxu0 0.0
    %1584 = vmatpush1.msra.mxu0 0.0
    %1585 = vmatprep.subr.mxu0 0.0
    %1586 = vmatpush1.msra.mxu0 0.0
    %1587 = vmatprep.subr.mxu0 0.0
    %1588 = vmatpush1.msra.mxu0 0.0
    %1589 = vmatprep.subr.mxu0 0.0
    %1590 = vmatpush1.msra.mxu0 0.0
    %1591 = vmatprep.subr.mxu0 0.0
    %1592 = vmatpush1.msra.mxu0 0.0
    %1593 = vmatprep.subr.mxu0 0.0
    %1594 = vmatpush1.msra.mxu0 0.0
    %1595 = vmatprep.subr.mxu0 0.0
    %1596 = vmatpush1.msra.mxu0 0.0
    %1597 = vmatprep.subr.mxu0 0.0
    %1598 = vmatpush1.msra.mxu0 0.0
    %1599 = vmatprep.subr.mxu0 0.0
    %1600 = vmatpush1.msra.mxu0 0.0
    %1601 = vmatprep.subr.mxu0 0.0
    %1602 = vmatpush1.msra.mxu0 0.0
    %1603 = vmatprep.subr.mxu0 0.0
    %1604 = vmatpush1.msra.mxu0 0.0
    %1605 = vmatprep.subr.mxu0 0.0
    %1606 = vmatpush1.msra.mxu0 0.0
    %1607 = vmatprep.subr.mxu0 0.0
    %1608 = vmatpush1.msra.mxu0 0.0
    %1609 = vmatprep.subr.mxu0 0.0
    %1610 = vmatpush1.msra.mxu0 0.0
    %1611 = vmatprep.subr.mxu0 0.0
    %1612 = vmatpush1.msra.mxu0 0.0
    %1613 = vmatprep.subr.mxu0 0.0
    %1614 = vmatpush1.msra.mxu0 0.0
    %1615 = vmatprep.subr.mxu0 0.0
    %1616 = vmatpush1.msra.mxu0 0.0
    %1617 = vmatprep.subr.mxu0 0.0
    %1618 = vmatpush1.msra.mxu0 0.0
    %1619 = vmatprep.subr.mxu0 0.0
    %1620 = vmatpush1.msra.mxu0 0.0
    %1621 = vmatprep.subr.mxu0 0.0
    %1622 = vmatpush1.msra.mxu0 0.0
    %1623 = vmatprep.subr.mxu0 0.0
    %1624 = vmatpush1.msra.mxu0 0.0
    %1625 = vmatprep.subr.mxu0 0.0
    %1626 = vmatpush1.msra.mxu0 0.0
    %1627 = vmatprep.mubr.f32.mxu0 0.0
    %1628 = vmatmul.mubr.f32.gmra.mrb[0].mxu0 %v1561
    %v1629 = vpop.f32.mrb[0].mxu0
    %v1630 = vadd.f32 0.0, %v1629
    %v1631 = vpop.f32.mrb[0].mxu0
    %1632 = vdwg.mxu0
    %1635 = vrot.lane.b32.xlu0 %v894, 8
    %v1636 = vpop.permute.xlu0 %1635
    %1637 = vrot.lane.b32.xlu0 %v970, 8
    %v1638 = vpop.permute.xlu0 %1637
    %1643 = vrot.lane.b32.xlu0 %v1224, 16
    %v1644 = vpop.permute.xlu0 %1643
    %1645 = vrot.lane.b32.xlu0 %v1300, 16
    %v1646 = vpop.permute.xlu0 %1645
    %1651 = vrot.lane.b32.xlu0 %v1554, 24
    %v1652 = vpop.permute.xlu0 %1651
    %1653 = vrot.lane.b32.xlu0 %v1630, 24
    %v1654 = vpop.permute.xlu0 %1653
    %v1657 = vsel %vm315, %v564, %v1636
    %v1658 = vsel %vm315, %v640, %v1638
    %vm1659 = vcmask 130048
    %v1660 = vsel %vm1659, %v1657, %v1644
    %v1661 = vsel %vm1659, %v1658, %v1646
    %vm1662 = vcmask 195584
    %v1663 = vsel %vm1662, %v1660, %v1652
    %v1664 = vsel %vm1662, %v1661, %v1654
    %v1665 = vld [vmem:[#allocation10] sm:$0xff]
    %v1666 = vld [vmem:[#allocation10 + $0x8] sm:$0xff]
    %v1667 = vld [vmem:[#allocation10 + $0x10] sm:$0xff]
    %v1668 = vld [vmem:[#allocation10 + $0x18] sm:$0xff]
    %v1669 = vld [vmem:[%s8] sm:$0x1]
    %v1670 = vlaneseq
    %v1671 = vshrl.u32 %v1670, 7
    %v1672 = vsub.s32 0, %v1671
    %v1673 = vrot.slane %v1669, %v1672
    %v1675 = vsel %vm136, %v1663, 0
    %v1678 = vsel %vm136, %v1664, 0
    %1680 = vmatprep.subr.mxu0 0.0
    %1681 = vmatpush1.msra.mxu0 %v1665
    %1682 = vmatprep.subr.mxu0 0.0
    %1683 = vmatpush1.msra.mxu0 %v1666
    %1684 = vmatprep.subr.mxu0 0.0
    %1685 = vmatpush1.msra.mxu0 %v1667
    %1686 = vmatprep.subr.mxu0 0.0
    %1687 = vmatpush1.msra.mxu0 %v1668
    %1688 = vmatprep.subr.mxu0 0.0
    %1689 = vmatpush1.msra.mxu0 0.0
    %1690 = vmatprep.subr.mxu0 0.0
    %1691 = vmatpush1.msra.mxu0 0.0
    %1692 = vmatprep.subr.mxu0 0.0
    %1693 = vmatpush1.msra.mxu0 0.0
    %1694 = vmatprep.subr.mxu0 0.0
    %1695 = vmatpush1.msra.mxu0 0.0
    %1696 = vmatprep.subr.mxu0 0.0
    %1697 = vmatpush1.msra.mxu0 0.0
    %1698 = vmatprep.subr.mxu0 0.0
    %1699 = vmatpush1.msra.mxu0 0.0
    %1700 = vmatprep.subr.mxu0 0.0
    %1701 = vmatpush1.msra.mxu0 0.0
    %1702 = vmatprep.subr.mxu0 0.0
    %1703 = vmatpush1.msra.mxu0 0.0
    %1704 = vmatprep.subr.mxu0 0.0
    %1705 = vmatpush1.msra.mxu0 0.0
    %1706 = vmatprep.subr.mxu0 0.0
    %1707 = vmatpush1.msra.mxu0 0.0
    %1708 = vmatprep.subr.mxu0 0.0
    %1709 = vmatpush1.msra.mxu0 0.0
    %1710 = vmatprep.subr.mxu0 0.0
    %1711 = vmatpush1.msra.mxu0 0.0
    %1712 = vmatprep.subr.mxu0 0.0
    %1713 = vmatpush1.msra.mxu0 0.0
    %1714 = vmatprep.subr.mxu0 0.0
    %1715 = vmatpush1.msra.mxu0 0.0
    %1716 = vmatprep.subr.mxu0 0.0
    %1717 = vmatpush1.msra.mxu0 0.0
    %1718 = vmatprep.subr.mxu0 0.0
    %1719 = vmatpush1.msra.mxu0 0.0
    %1720 = vmatprep.subr.mxu0 0.0
    %1721 = vmatpush1.msra.mxu0 0.0
    %1722 = vmatprep.subr.mxu0 0.0
    %1723 = vmatpush1.msra.mxu0 0.0
    %1724 = vmatprep.subr.mxu0 0.0
    %1725 = vmatpush1.msra.mxu0 0.0
    %1726 = vmatprep.subr.mxu0 0.0
    %1727 = vmatpush1.msra.mxu0 0.0
    %1728 = vmatprep.subr.mxu0 0.0
    %1729 = vmatpush1.msra.mxu0 0.0
    %1730 = vmatprep.subr.mxu0 0.0
    %1731 = vmatpush1.msra.mxu0 0.0
    %1732 = vmatprep.subr.mxu0 0.0
    %1733 = vmatpush1.msra.mxu0 0.0
    %1734 = vmatprep.subr.mxu0 0.0
    %1735 = vmatpush1.msra.mxu0 0.0
    %1736 = vmatprep.subr.mxu0 0.0
    %1737 = vmatpush1.msra.mxu0 0.0
    %1738 = vmatprep.subr.mxu0 0.0
    %1739 = vmatpush1.msra.mxu0 0.0
    %1740 = vmatprep.subr.mxu0 0.0
    %1741 = vmatpush1.msra.mxu0 0.0
    %1742 = vmatprep.subr.mxu0 0.0
    %1743 = vmatpush1.msra.mxu0 0.0
    %1744 = vmatprep.mubr.f32.mxu0 0.0
    %1745 = vmatmul.mubr.f32.gmra.mrb[0].mxu0 %v1675
    %v1746 = vpop.f32.mrb[0].mxu0
    %v1747 = vadd.f32 %v1673, %v1746
    %v1748 = vpop.f32.mrb[0].mxu0
    %1749 = vmatprep.mubr.f32.mxu0 0.0
    %1750 = vmatmul.mubr.f32.gmra.mrb[0].mxu0 %v1678
    %v1751 = vpop.f32.mrb[0].mxu0
    %v1752 = vadd.f32 %v1673, %v1751
    %v1753 = vpop.f32.mrb[0].mxu0
    %1754 = vdwg.mxu0
    %v1755 = vadd.f32 %v210, %v1747
    %v1756 = vadd.f32 %v215, %v1752
    %v1757 = vld [vmem:[%s8 + $0x3] sm:$0x1]
    %v1758 = vld [vmem:[%s8 + $0x4] sm:$0x1]
    %v1759 = vsel %vm136, %v1755, 0.0
    %1760 = vadd.xlane.f32.xlu0 %v1759
    %v1761 = vpop.xlane.xlu0 %1760
    %v1762 = vsel %vm136, %v1756, 0.0
    %1763 = vadd.xlane.f32.xlu0 %v1762
    %v1764 = vpop.xlane.xlu0 %1763
    %v1765 = vrcp.pop 32.0
    %v1766 = vmul.f32 %v1761, %v1765
    %v1767 = vmul.f32 %v1764, %v1765
    %v1768 = vsub.f32 %v1755, %v1766
    %v1769 = vsub.f32 %v1756, %v1767
    %v1770 = vmul.f32 %v1768, %v1768
    %v1771 = vmul.f32 %v1769, %v1769
    %v1772 = vsel %vm136, %v1770, 0.0
    %1773 = vadd.xlane.f32.xlu0 %v1772
    %v1774 = vpop.xlane.xlu0 %1773
    %v1775 = vsel %vm136, %v1771, 0.0
    %1776 = vadd.xlane.f32.xlu0 %v1775
    %v1777 = vpop.xlane.xlu0 %1776
    %v1778 = vmul.f32 %v1774, %v1765
    %v1779 = vmul.f32 %v1777, %v1765
    %v1780 = vadd.f32 %v1778, 1e-05
    %v1781 = vadd.f32 %v1779, 1e-05
    %v1782 = vrsqrt.pop %v1780
    %v1783 = vrsqrt.pop %v1781
    %v1784 = vmul.f32 %v1768, %v1782
    %v1785 = vmul.f32 %v1769, %v1783
    %v1786 = vlaneseq
    %v1787 = vshrl.u32 %v1786, 7
    %v1788 = vsub.s32 0, %v1787
    %v1789 = vrot.slane %v1757, %v1788
    %v1790 = vmul.f32 %v1784, %v1789
    %v1791 = vmul.f32 %v1785, %v1789
    %v1792 = vlaneseq
    %v1793 = vshrl.u32 %v1792, 7
    %v1794 = vsub.s32 0, %v1793
    %v1795 = vrot.slane %v1758, %v1794
    %v1796 = vadd.f32 %v1790, %v1795
    %v1797 = vadd.f32 %v1791, %v1795
    %v1798 = vld [vmem:[#allocation11] sm:$0xff]
    %v1799 = vld [vmem:[#allocation11 + $0x8] sm:$0xff]
    %v1800 = vld [vmem:[#allocation11 + $0x10] sm:$0xff]
    %v1801 = vld [vmem:[#allocation11 + $0x18] sm:$0xff]
    %v1802 = vld [vmem:[%s8 + $0x1] sm:$0x1]
    %v1803 = vlaneseq
    %v1804 = vshrl.u32 %v1803, 7
    %v1805 = vsub.s32 0, %v1804
    %v1806 = vrot.slane %v1802, %v1805
    %v1808 = vsel %vm136, %v1796, 0
    %v1811 = vsel %vm136, %v1797, 0
    %1813 = vmatprep.subr.mxu0 0.0
    %1814 = vmatpush1.msra.mxu0 %v1798
    %1815 = vmatprep.subr.mxu0 0.0
    %1816 = vmatpush1.msra.mxu0 %v1799
    %1817 = vmatprep.subr.mxu0 0.0
    %1818 = vmatpush1.msra.mxu0 %v1800
    %1819 = vmatprep.subr.mxu0 0.0
    %1820 = vmatpush1.msra.mxu0 %v1801
    %1821 = vmatprep.subr.mxu0 0.0
    %1822 = vmatpush1.msra.mxu0 0.0
    %1823 = vmatprep.subr.mxu0 0.0
    %1824 = vmatpush1.msra.mxu0 0.0
    %1825 = vmatprep.subr.mxu0 0.0
    %1826 = vmatpush1.msra.mxu0 0.0
    %1827 = vmatprep.subr.mxu0 0.0
    %1828 = vmatpush1.msra.mxu0 0.0
    %1829 = vmatprep.subr.mxu0 0.0
    %1830 = vmatpush1.msra.mxu0 0.0
    %1831 = vmatprep.subr.mxu0 0.0
    %1832 = vmatpush1.msra.mxu0 0.0
    %1833 = vmatprep.subr.mxu0 0.0
    %1834 = vmatpush1.msra.mxu0 0.0
    %1835 = vmatprep.subr.mxu0 0.0
    %1836 = vmatpush1.msra.mxu0 0.0
    %1837 = vmatprep.subr.mxu0 0.0
    %1838 = vmatpush1.msra.mxu0 0.0
    %1839 = vmatprep.subr.mxu0 0.0
    %1840 = vmatpush1.msra.mxu0 0.0
    %1841 = vmatprep.subr.mxu0 0.0
    %1842 = vmatpush1.msra.mxu0 0.0
    %1843 = vmatprep.subr.mxu0 0.0
    %1844 = vmatpush1.msra.mxu0 0.0
    %1845 = vmatprep.subr.mxu0 0.0
    %1846 = vmatpush1.msra.mxu0 0.0
    %1847 = vmatprep.subr.mxu0 0.0
    %1848 = vmatpush1.msra.mxu0 0.0
    %1849 = vmatprep.subr.mxu0 0.0
    %1850 = vmatpush1.msra.mxu0 0.0
    %1851 = vmatprep.subr.mxu0 0.0
    %1852 = vmatpush1.msra.mxu0 0.0
    %1853 = vmatprep.subr.mxu0 0.0
    %1854 = vmatpush1.msra.mxu0 0.0
    %1855 = vmatprep.subr.mxu0 0.0
    %1856 = vmatpush1.msra.mxu0 0.0
    %1857 = vmatprep.subr.mxu0 0.0
    %1858 = vmatpush1.msra.mxu0 0.0
    %1859 = vmatprep.subr.mxu0 0.0
    %1860 = vmatpush1.msra.mxu0 0.0
    %1861 = vmatprep.subr.mxu0 0.0
    %1862 = vmatpush1.msra.mxu0 0.0
    %1863 = vmatprep.subr.mxu0 0.0
    %1864 = vmatpush1.msra.mxu0 0.0
    %1865 = vmatprep.subr.mxu0 0.0
    %1866 = vmatpush1.msra.mxu0 0.0
    %1867 = vmatprep.subr.mxu0 0.0
    %1868 = vmatpush1.msra.mxu0 0.0
    %1869 = vmatprep.subr.mxu0 0.0
    %1870 = vmatpush1.msra.mxu0 0.0
    %1871 = vmatprep.subr.mxu0 0.0
    %1872 = vmatpush1.msra.mxu0 0.0
    %1873 = vmatprep.subr.mxu0 0.0
    %1874 = vmatpush1.msra.mxu0 0.0
    %1875 = vmatprep.subr.mxu0 0.0
    %1876 = vmatpush1.msra.mxu0 0.0
    %1877 = vmatprep.mubr.f32.mxu0 0.0
    %1878 = vmatmul.mubr.f32.gmra.mrb[0].mxu0 %v1808
    %v1879 = vpop.f32.mrb[0].mxu0
    %v1880 = vadd.f32 %v1806, %v1879
    %v1881 = vpop.f32.mrb[0].mxu0
    %1882 = vmatprep.mubr.f32.mxu0 0.0
    %1883 = vmatmul.mubr.f32.gmra.mrb[0].mxu0 %v1811
    %v1884 = vpop.f32.mrb[0].mxu0
    %v1885 = vadd.f32 %v1806, %v1884
    %v1886 = vpop.f32.mrb[0].mxu0
    %1887 = vdwg.mxu0
    %v1888 = vmax.f32 %v1880, 0.0
    %v1889 = vmax.f32 %v1885, 0.0
    %v1890 = vld [vmem:[#allocation13] sm:$0xff]
    %v1891 = vld [vmem:[#allocation13 + $0x8] sm:$0xff]
    %v1892 = vld [vmem:[#allocation13 + $0x10] sm:$0xff]
    %v1893 = vld [vmem:[#allocation13 + $0x18] sm:$0xff]
    %v1894 = vld [vmem:[%s8 + $0x2] sm:$0x1]
    %v1895 = vlaneseq
    %v1896 = vshrl.u32 %v1895, 7
    %v1897 = vsub.s32 0, %v1896
    %v1898 = vrot.slane %v1894, %v1897
    %v1900 = vsel %vm136, %v1888, 0
    %v1903 = vsel %vm136, %v1889, 0
    %1905 = vmatprep.subr.mxu0 0.0
    %1906 = vmatpush1.msra.mxu0 %v1890
    %1907 = vmatprep.subr.mxu0 0.0
    %1908 = vmatpush1.msra.mxu0 %v1891
    %1909 = vmatprep.subr.mxu0 0.0
    %1910 = vmatpush1.msra.mxu0 %v1892
    %1911 = vmatprep.subr.mxu0 0.0
    %1912 = vmatpush1.msra.mxu0 %v1893
    %1913 = vmatprep.subr.mxu0 0.0
    %1914 = vmatpush1.msra.mxu0 0.0
    %1915 = vmatprep.subr.mxu0 0.0
    %1916 = vmatpush1.msra.mxu0 0.0
    %1917 = vmatprep.subr.mxu0 0.0
    %1918 = vmatpush1.msra.mxu0 0.0
    %1919 = vmatprep.subr.mxu0 0.0
    %1920 = vmatpush1.msra.mxu0 0.0
    %1921 = vmatprep.subr.mxu0 0.0
    %1922 = vmatpush1.msra.mxu0 0.0
    %1923 = vmatprep.subr.mxu0 0.0
    %1924 = vmatpush1.msra.mxu0 0.0
    %1925 = vmatprep.subr.mxu0 0.0
    %1926 = vmatpush1.msra.mxu0 0.0
    %1927 = vmatprep.subr.mxu0 0.0
    %1928 = vmatpush1.msra.mxu0 0.0
    %1929 = vmatprep.subr.mxu0 0.0
    %1930 = vmatpush1.msra.mxu0 0.0
    %1931 = vmatprep.subr.mxu0 0.0
    %1932 = vmatpush1.msra.mxu0 0.0
    %1933 = vmatprep.subr.mxu0 0.0
    %1934 = vmatpush1.msra.mxu0 0.0
    %1935 = vmatprep.subr.mxu0 0.0
    %1936 = vmatpush1.msra.mxu0 0.0
    %1937 = vmatprep.subr.mxu0 0.0
    %1938 = vmatpush1.msra.mxu0 0.0
    %1939 = vmatprep.subr.mxu0 0.0
    %1940 = vmatpush1.msra.mxu0 0.0
    %1941 = vmatprep.subr.mxu0 0.0
    %1942 = vmatpush1.msra.mxu0 0.0
    %1943 = vmatprep.subr.mxu0 0.0
    %1944 = vmatpush1.msra.mxu0 0.0
    %1945 = vmatprep.subr.mxu0 0.0
    %1946 = vmatpush1.msra.mxu0 0.0
    %1947 = vmatprep.subr.mxu0 0.0
    %1948 = vmatpush1.msra.mxu0 0.0
    %1949 = vmatprep.subr.mxu0 0.0
    %1950 = vmatpush1.msra.mxu0 0.0
    %1951 = vmatprep.subr.mxu0 0.0
    %1952 = vmatpush1.msra.mxu0 0.0
    %1953 = vmatprep.subr.mxu0 0.0
    %1954 = vmatpush1.msra.mxu0 0.0
    %1955 = vmatprep.subr.mxu0 0.0
    %1956 = vmatpush1.msra.mxu0 0.0
    %1957 = vmatprep.subr.mxu0 0.0
    %1958 = vmatpush1.msra.mxu0 0.0
    %1959 = vmatprep.subr.mxu0 0.0
    %1960 = vmatpush1.msra.mxu0 0.0
    %1961 = vmatprep.subr.mxu0 0.0
    %1962 = vmatpush1.msra.mxu0 0.0
    %1963 = vmatprep.subr.mxu0 0.0
    %1964 = vmatpush1.msra.mxu0 0.0
    %1965 = vmatprep.subr.mxu0 0.0
    %1966 = vmatpush1.msra.mxu0 0.0
    %1967 = vmatprep.subr.mxu0 0.0
    %1968 = vmatpush1.msra.mxu0 0.0
    %1969 = vmatprep.mubr.f32.mxu0 0.0
    %1970 = vmatmul.mubr.f32.gmra.mrb[0].mxu0 %v1900
    %v1971 = vpop.f32.mrb[0].mxu0
    %v1972 = vadd.f32 %v1898, %v1971
    %v1973 = vpop.f32.mrb[0].mxu0
    %1974 = vmatprep.mubr.f32.mxu0 0.0
    %1975 = vmatmul.mubr.f32.gmra.mrb[0].mxu0 %v1903
    %v1976 = vpop.f32.mrb[0].mxu0
    %v1977 = vadd.f32 %v1898, %v1976
    %v1978 = vpop.f32.mrb[0].mxu0
    %1979 = vdwg.mxu0
    %v1980 = vadd.f32 %v1796, %v1972
    %v1981 = vadd.f32 %v1797, %v1977
    %v1982 = vld [vmem:[%s8 + $0x5] sm:$0x1]
    %v1983 = vld [vmem:[%s8 + $0x6] sm:$0x1]
    %v1984 = vsel %vm136, %v1980, 0.0
    %1985 = vadd.xlane.f32.xlu0 %v1984
    %v1986 = vpop.xlane.xlu0 %1985
    %v1987 = vsel %vm136, %v1981, 0.0
    %1988 = vadd.xlane.f32.xlu0 %v1987
    %v1989 = vpop.xlane.xlu0 %1988
    %v1990 = vmul.f32 %v1986, %v1765
    %v1991 = vmul.f32 %v1989, %v1765
    %v1992 = vsub.f32 %v1980, %v1990
    %v1993 = vsub.f32 %v1981, %v1991
    %v1994 = vmul.f32 %v1992, %v1992
    %v1995 = vmul.f32 %v1993, %v1993
    %v1996 = vsel %vm136, %v1994, 0.0
    %1997 = vadd.xlane.f32.xlu0 %v1996
    %v1998 = vpop.xlane.xlu0 %1997
    %v1999 = vsel %vm136, %v1995, 0.0
    %2000 = vadd.xlane.f32.xlu0 %v1999
    %v2001 = vpop.xlane.xlu0 %2000
    %v2002 = vmul.f32 %v1998, %v1765
    %v2003 = vmul.f32 %v2001, %v1765
    %v2004 = vadd.f32 %v2002, 1e-05
    %v2005 = vadd.f32 %v2003, 1e-05
    %v2006 = vrsqrt.pop %v2004
    %v2007 = vrsqrt.pop %v2005
    %v2008 = vmul.f32 %v1992, %v2006
    %v2009 = vmul.f32 %v1993, %v2007
    %v2010 = vlaneseq
    %v2011 = vshrl.u32 %v2010, 7
    %v2012 = vsub.s32 0, %v2011
    %v2013 = vrot.slane %v1982, %v2012
    %v2014 = vmul.f32 %v2008, %v2013
    %v2015 = vmul.f32 %v2009, %v2013
    %v2016 = vlaneseq
    %v2017 = vshrl.u32 %v2016, 7
    %v2018 = vsub.s32 0, %v2017
    %v2019 = vrot.slane %v1983, %v2018
    %v2020 = vadd.f32 %v2014, %v2019
    %v2021 = vadd.f32 %v2015, %v2019
    %2022 = vst.msk [vmem:[#allocation14] sm:$0xff] %vm136, %v2020
    %2023 = vst.msk [vmem:[#allocation14 + $0x8] sm:$0xff] %vm136, %v2021
    // Predicated region
    $region66: #{tpu_custom_call.1} parent=1 // pred_check
      _
    $region67: #{tpu_custom_call.1} parent=1 // pred_check_branch
      %2025 = sbr.rel (0) target = $region69
    $region68: #{tpu_custom_call.1} parent=1 // pred_region
      %s2027 = ssub.s32 256, 256
      %2028 = vsyncadd [#allocation4], %s2027
      %s2029 = sshll.u32 [#allocation14], 4
      %s2030 = int_to_ptr.vmem [resolvable:$true] %s2029
      %2035 = dma.vmem_to_hbm [thread:$0]  %s2030, 256, %s9, [#allocation4], 128, 128, 8
    $region69: #{tpu_custom_call.1} parent=1 // pred_fallthru
      _
    // Predicated region
    $region70: #{tpu_custom_call.1} parent=1 // pred_check
      _
    $region71: #{tpu_custom_call.1} parent=1 // pred_check_branch
      %2037 = sbr.rel (0) target = $region73
    $region72: #{tpu_custom_call.1} parent=1 // pred_region
      %2038 = dma.done [#allocation4], 256
    $region73: #{tpu_custom_call.1} parent=1 // pred_fallthru
      _
    %2039 = vsyncpa [#allocation3], 1
    %2040 = vsyncpa [#allocation6], 1
    %2041 = vsyncpa [#allocation9], 1
    %2042 = vsyncpa [#allocation12], 1
    %2043 = vsyncpa [#allocation4], 1

</llo_original>
